<compile_context>
chip_gen: v6e
topology: v6e:2x2x1
jax: 0.10.0
libtpu: 0.0.40
codegen_flags: <defaults>
</compile_context>

<pallas_src>
import jax
import jax.numpy as jnp
from jax.experimental import pallas as pl
from jax.experimental.pallas import tpu as pltpu

# MLP layer sizes (from nn.Linear shapes in __init__)
DIMS = [784, 512, 256, 128, 64, 10]
K_PAD = 896     # 7 * 128: layer-1 contraction padded to full lane groups
OUT_PAD = 128   # lane-dense final output (sliced back to 10 in the wrapper)


def _mlp_kernel(x_ref,
                w1_ref, b1_ref,
                w2_ref, b2_ref,
                w3_ref, b3_ref,
                w4_ref, b4_ref,
                w5_ref, b5_ref,
                o_ref):
    """Fused 5-layer MLP, bf16 MXU matmuls with f32 accumulation."""
    h = x_ref[...]  # (TB, 896) bf16

    a = jnp.dot(h, w1_ref[...], preferred_element_type=jnp.float32) + b1_ref[...]
    a = jnp.maximum(a, 0.0)

    a = jnp.dot(a.astype(jnp.bfloat16), w2_ref[...],
                preferred_element_type=jnp.float32) + b2_ref[...]
    a = jnp.maximum(a, 0.0)

    a = jnp.dot(a.astype(jnp.bfloat16), w3_ref[...],
                preferred_element_type=jnp.float32) + b3_ref[...]
    a = jnp.maximum(a, 0.0)

    a = jnp.dot(a.astype(jnp.bfloat16), w4_ref[...],
                preferred_element_type=jnp.float32) + b4_ref[...]
    a = jnp.maximum(a, 0.0)

    a = jnp.dot(a.astype(jnp.bfloat16), w5_ref[...],
                preferred_element_type=jnp.float32) + b5_ref[...]
    o_ref[...] = a.astype(o_ref.dtype)


def _prepare_params(params):
    """Pad + cast the (in, out) / (1, out) f32 params for the kernel.

    Layer 1 weight rows are padded 784 -> 896 (zeros), the last layer's
    weight/bias columns are padded 10 -> 128 (zeros), and all weights are cast
    to bf16. Biases stay f32 (added on the f32 accumulator output).
    """
    kparams = []
    for li, (w, b) in enumerate(params):
        if li == 0:
            w = jnp.pad(w, ((0, K_PAD - w.shape[0]), (0, 0)))
        if li == len(params) - 1:
            w = jnp.pad(w, ((0, 0), (0, OUT_PAD - w.shape[1])))
            b = jnp.pad(b, ((0, 0), (0, OUT_PAD - b.shape[1])))
        kparams.append((w.astype(jnp.bfloat16), b.astype(jnp.float32)))
    return kparams


def dnn_forward(x, params, *, batch_tile=None):
    """Forward pass of DNN.

    x: (B, 1, 28, 28) or (B, 784) float32
    params: list of (W_t, b), W_t shape (in, out) f32, b shape (1, out) f32
    """
    if x.ndim > 2:
        x = x.reshape(x.shape[0], -1)  # nn.Flatten()
    B, F = x.shape
    assert F == DIMS[0], f"expected {DIMS[0]} input features, got {F}"

    # Pad the contraction dim to a multiple of 128 and halve DMA bytes (bf16).
    x = jnp.pad(x, ((0, 0), (0, K_PAD - F))).astype(jnp.bfloat16)

    # Batch tile: default 512 rows, multiple of 8 sublanes, capped at ~B/2 so
    # the grid has >= 2 steps (software pipelining + v7x megacore sharding).
    if batch_tile is None:
        batch_tile = 512
    half = -(-B // 2)
    half = -(-half // 8) * 8
    batch_tile = max(8, min(int(batch_tile), half))
    batch_tile = (batch_tile // 8) * 8

    grid_n = max(pl.cdiv(B, batch_tile), 2)
    b_pad = grid_n * batch_tile
    if b_pad != B:
        x = jnp.pad(x, ((0, b_pad - B), (0, 0)))

    kparams = _prepare_params(params)

    # x / out stream over the batch; weights & biases are pinned full blocks.
    in_specs = [pl.BlockSpec((batch_tile, K_PAD), lambda i: (i, 0))]
    flat_params = []
    for (w, b) in kparams:
        in_specs.append(pl.BlockSpec(w.shape, lambda i: (0, 0)))
        in_specs.append(pl.BlockSpec(b.shape, lambda i: (0, 0)))
        flat_params.extend([w, b])

    out_spec = pl.BlockSpec((batch_tile, OUT_PAD), lambda i: (i, 0))

    out_padded = pl.pallas_call(
        _mlp_kernel,
        out_shape=jax.ShapeDtypeStruct((b_pad, OUT_PAD), jnp.float32),
        grid_spec=pltpu.PrefetchScalarGridSpec(
            num_scalar_prefetch=0,
            grid=(grid_n,),
            in_specs=in_specs,
            out_specs=out_spec,
        ),
        compiler_params=pltpu.CompilerParams(
            dimension_semantics=("parallel",),
            vmem_limit_bytes=48 * 1024 * 1024,
        ),
    )(x, *flat_params)

    # Slice off batch padding and the lane padding of the 10-class output.
    return out_padded[:B, :DIMS[-1]]


def init_params(key):
    """PyTorch nn.Linear-style init; weights stored pre-transposed (in, out)."""
    params = []
    for i in range(len(DIMS) - 1):
        fan_in, fan_out = DIMS[i], DIMS[i + 1]
        key, kw, kb = jax.random.split(key, 3)
        bound = 1.0 / jnp.sqrt(fan_in)  # uniform(-1/sqrt(in), 1/sqrt(in))
        w = jax.random.uniform(kw, (fan_out, fan_in), jnp.float32, -bound, bound)
        b = jax.random.uniform(kb, (fan_out,), jnp.float32, -bound, bound)
        params.append((w.T, b.reshape(1, fan_out)))
    return params


def reference_forward_f32(x, params):
    """Pure-JAX f32 reference (PyTorch-equivalent semantics)."""
    h = x.reshape(x.shape[0], -1)
    for i, (w_t, b) in enumerate(params):
        h = h @ w_t + b
        if i < len(params) - 1:
            h = jnp.maximum(h, 0.0)
    return h


def reference_forward_bf16(x, params):
    """Pure-JAX reference emulating the kernel's bf16-matmul/f32-accum math."""
    h = x.reshape(x.shape[0], -1)
    for i, (w_t, b) in enumerate(params):
        h = jnp.dot(h.astype(jnp.bfloat16), w_t.astype(jnp.bfloat16),
                    preferred_element_type=jnp.float32) + b
        if i < len(params) - 1:
            h = jnp.maximum(h, 0.0)
    return h


if __name__ == "__main__":
    key = jax.random.PRNGKey(0)
    key, kx = jax.random.split(key)

    # Small MNIST-like batch in NCHW, as the Flatten() in the module implies.
    B = 8
    x = jax.random.normal(kx, (B, 1, 28, 28), jnp.float32)

    params = init_params(key)

    out = dnn_forward(x, params)
    out = jax.block_until_ready(out)
    assert out.shape == (B, 10), out.shape

    # Tight check vs a reference using the same bf16-matmul / f32-accum math.
    ref_bf16 = reference_forward_bf16(x, params)
    assert jnp.allclose(out, ref_bf16, atol=1e-3, rtol=1e-3), \
        "mismatch vs. bf16-emulating reference"

    # Loose check vs the pure-f32 (PyTorch-equivalent) reference.
    ref_f32 = reference_forward_f32(x, params)
    assert jnp.allclose(out, ref_f32, atol=5e-2, rtol=5e-2), \
        "mismatch vs. f32 reference"

    print("KERNEL_OK")
</pallas_src>

<mosaic_0001>
module attributes {stable_mosaic.version = 11 : i64} {
  func.func @_mlp_kernel(%arg0: i32, %arg1: memref<8x896xbf16, #tpu.memory_space<vmem>>, %arg2: memref<896x512xbf16, #tpu.memory_space<vmem>>, %arg3: memref<1x512xf32, #tpu.memory_space<vmem>>, %arg4: memref<512x256xbf16, #tpu.memory_space<vmem>>, %arg5: memref<1x256xf32, #tpu.memory_space<vmem>>, %arg6: memref<256x128xbf16, #tpu.memory_space<vmem>>, %arg7: memref<1x128xf32, #tpu.memory_space<vmem>>, %arg8: memref<128x64xbf16, #tpu.memory_space<vmem>>, %arg9: memref<1x64xf32, #tpu.memory_space<vmem>>, %arg10: memref<64x128xbf16, #tpu.memory_space<vmem>>, %arg11: memref<1x128xf32, #tpu.memory_space<vmem>>, %arg12: memref<8x128xf32, #tpu.memory_space<vmem>>) attributes {dimension_semantics = [#tpu.dimension_semantics<parallel>], iteration_bounds = array<i64: 2>, scalar_prefetch = 0 : i64, scratch_operands = 0 : i64, tpu.core_type = #tpu.core_type<tc>, window_params = [{transform_indices = @transform_0, window_bounds = array<i64: 8, 896>}, {pipeline_mode = #tpu.pipeline_mode<synchronous>, transform_indices = @transform_1, window_bounds = array<i64: 896, 512>}, {pipeline_mode = #tpu.pipeline_mode<synchronous>, transform_indices = @transform_2, window_bounds = array<i64: 1, 512>}, {pipeline_mode = #tpu.pipeline_mode<synchronous>, transform_indices = @transform_3, window_bounds = array<i64: 512, 256>}, {pipeline_mode = #tpu.pipeline_mode<synchronous>, transform_indices = @transform_4, window_bounds = array<i64: 1, 256>}, {pipeline_mode = #tpu.pipeline_mode<synchronous>, transform_indices = @transform_5, window_bounds = array<i64: 256, 128>}, {pipeline_mode = #tpu.pipeline_mode<synchronous>, transform_indices = @transform_6, window_bounds = array<i64: 1, 128>}, {pipeline_mode = #tpu.pipeline_mode<synchronous>, transform_indices = @transform_7, window_bounds = array<i64: 128, 64>}, {pipeline_mode = #tpu.pipeline_mode<synchronous>, transform_indices = @transform_8, window_bounds = array<i64: 1, 64>}, {pipeline_mode = #tpu.pipeline_mode<synchronous>, transform_indices = @transform_9, window_bounds = array<i64: 64, 128>}, {pipeline_mode = #tpu.pipeline_mode<synchronous>, transform_indices = @transform_10, window_bounds = array<i64: 1, 128>}, {transform_indices = @transform_11, window_bounds = array<i64: 8, 128>}]} {
    %c0 = arith.constant 0 : index
    %c0_0 = arith.constant 0 : index
    %0 = vector.load %arg1[%c0, %c0_0] : memref<8x896xbf16, #tpu.memory_space<vmem>>, vector<8x896xbf16>
    %c0_1 = arith.constant 0 : index
    %c0_2 = arith.constant 0 : index
    %1 = vector.load %arg2[%c0_1, %c0_2] : memref<896x512xbf16, #tpu.memory_space<vmem>>, vector<896x512xbf16>
    %cst = arith.constant dense<0.000000e+00> : vector<8x512xf32>
    %2 = tpu.matmul %0, %1, %cst {dimension_numbers = #tpu.dot_dimension_numbers<[1], [0], [0], [1], [0, 0, 1, 1], [], []>} : vector<8x896xbf16>, vector<896x512xbf16>, vector<8x512xf32> -> vector<8x512xf32>
    %c0_3 = arith.constant 0 : index
    %c0_4 = arith.constant 0 : index
    %3 = vector.load %arg3[%c0_3, %c0_4] : memref<1x512xf32, #tpu.memory_space<vmem>>, vector<1x512xf32>
    %4 = vector.broadcast %3 : vector<1x512xf32> to vector<8x512xf32>
    %5 = arith.addf %2, %4 : vector<8x512xf32>
    %cst_5 = arith.constant 0.000000e+00 : f32
    %6 = vector.broadcast %cst_5 : f32 to vector<8x512xf32>
    %7 = arith.maximumf %5, %6 : vector<8x512xf32>
    %8 = arith.truncf %7 : vector<8x512xf32> to vector<8x512xbf16>
    %c0_6 = arith.constant 0 : index
    %c0_7 = arith.constant 0 : index
    %9 = vector.load %arg4[%c0_6, %c0_7] : memref<512x256xbf16, #tpu.memory_space<vmem>>, vector<512x256xbf16>
    %cst_8 = arith.constant dense<0.000000e+00> : vector<8x256xf32>
    %10 = tpu.matmul %8, %9, %cst_8 {dimension_numbers = #tpu.dot_dimension_numbers<[1], [0], [0], [1], [0, 0, 1, 1], [], []>} : vector<8x512xbf16>, vector<512x256xbf16>, vector<8x256xf32> -> vector<8x256xf32>
    %c0_9 = arith.constant 0 : index
    %c0_10 = arith.constant 0 : index
    %11 = vector.load %arg5[%c0_9, %c0_10] : memref<1x256xf32, #tpu.memory_space<vmem>>, vector<1x256xf32>
    %12 = vector.broadcast %11 : vector<1x256xf32> to vector<8x256xf32>
    %13 = arith.addf %10, %12 : vector<8x256xf32>
    %cst_11 = arith.constant 0.000000e+00 : f32
    %14 = vector.broadcast %cst_11 : f32 to vector<8x256xf32>
    %15 = arith.maximumf %13, %14 : vector<8x256xf32>
    %16 = arith.truncf %15 : vector<8x256xf32> to vector<8x256xbf16>
    %c0_12 = arith.constant 0 : index
    %c0_13 = arith.constant 0 : index
    %17 = vector.load %arg6[%c0_12, %c0_13] : memref<256x128xbf16, #tpu.memory_space<vmem>>, vector<256x128xbf16>
    %cst_14 = arith.constant dense<0.000000e+00> : vector<8x128xf32>
    %18 = tpu.matmul %16, %17, %cst_14 {dimension_numbers = #tpu.dot_dimension_numbers<[1], [0], [0], [1], [0, 0, 1, 1], [], []>} : vector<8x256xbf16>, vector<256x128xbf16>, vector<8x128xf32> -> vector<8x128xf32>
    %c0_15 = arith.constant 0 : index
    %c0_16 = arith.constant 0 : index
    %19 = vector.load %arg7[%c0_15, %c0_16] : memref<1x128xf32, #tpu.memory_space<vmem>>, vector<1x128xf32>
    %20 = vector.broadcast %19 : vector<1x128xf32> to vector<8x128xf32>
    %21 = arith.addf %18, %20 : vector<8x128xf32>
    %cst_17 = arith.constant 0.000000e+00 : f32
    %22 = vector.broadcast %cst_17 : f32 to vector<8x128xf32>
    %23 = arith.maximumf %21, %22 : vector<8x128xf32>
    %24 = arith.truncf %23 : vector<8x128xf32> to vector<8x128xbf16>
    %c0_18 = arith.constant 0 : index
    %c0_19 = arith.constant 0 : index
    %25 = vector.load %arg8[%c0_18, %c0_19] : memref<128x64xbf16, #tpu.memory_space<vmem>>, vector<128x64xbf16>
    %cst_20 = arith.constant dense<0.000000e+00> : vector<8x64xf32>
    %26 = tpu.matmul %24, %25, %cst_20 {dimension_numbers = #tpu.dot_dimension_numbers<[1], [0], [0], [1], [0, 0, 1, 1], [], []>} : vector<8x128xbf16>, vector<128x64xbf16>, vector<8x64xf32> -> vector<8x64xf32>
    %c0_21 = arith.constant 0 : index
    %c0_22 = arith.constant 0 : index
    %27 = vector.load %arg9[%c0_21, %c0_22] : memref<1x64xf32, #tpu.memory_space<vmem>>, vector<1x64xf32>
    %28 = vector.broadcast %27 : vector<1x64xf32> to vector<8x64xf32>
    %29 = arith.addf %26, %28 : vector<8x64xf32>
    %cst_23 = arith.constant 0.000000e+00 : f32
    %30 = vector.broadcast %cst_23 : f32 to vector<8x64xf32>
    %31 = arith.maximumf %29, %30 : vector<8x64xf32>
    %32 = arith.truncf %31 : vector<8x64xf32> to vector<8x64xbf16>
    %c0_24 = arith.constant 0 : index
    %c0_25 = arith.constant 0 : index
    %33 = vector.load %arg10[%c0_24, %c0_25] : memref<64x128xbf16, #tpu.memory_space<vmem>>, vector<64x128xbf16>
    %cst_26 = arith.constant dense<0.000000e+00> : vector<8x128xf32>
    %34 = tpu.matmul %32, %33, %cst_26 {dimension_numbers = #tpu.dot_dimension_numbers<[1], [0], [0], [1], [0, 0, 1, 1], [], []>} : vector<8x64xbf16>, vector<64x128xbf16>, vector<8x128xf32> -> vector<8x128xf32>
    %c0_27 = arith.constant 0 : index
    %c0_28 = arith.constant 0 : index
    %35 = vector.load %arg11[%c0_27, %c0_28] : memref<1x128xf32, #tpu.memory_space<vmem>>, vector<1x128xf32>
    %36 = vector.broadcast %35 : vector<1x128xf32> to vector<8x128xf32>
    %37 = arith.addf %34, %36 : vector<8x128xf32>
    %c0_29 = arith.constant 0 : index
    %c0_30 = arith.constant 0 : index
    %38 = vector.load %arg12[%c0_29, %c0_30] : memref<8x128xf32, #tpu.memory_space<vmem>>, vector<8x128xf32>
    tpu.vector_store %arg12[%c0_29, %c0_30], %37 {strides = array<i32>} : memref<8x128xf32, #tpu.memory_space<vmem>>, vector<8x128xf32>,
    return
  }
  func.func @transform_0(%arg0: i32) -> (i32, i32) {
    %c0_i32 = arith.constant 0 : i32
    %c0_i32_0 = arith.constant 0 : i32
    return %arg0, %c0_i32 : i32, i32
  }
  func.func @transform_1(%arg0: i32) -> (i32, i32) {
    %c0_i32 = arith.constant 0 : i32
    %c0_i32_0 = arith.constant 0 : i32
    %c0_i32_1 = arith.constant 0 : i32
    return %c0_i32, %c0_i32_0 : i32, i32
  }
  func.func @transform_2(%arg0: i32) -> (i32, i32) {
    %c0_i32 = arith.constant 0 : i32
    %c0_i32_0 = arith.constant 0 : i32
    %c0_i32_1 = arith.constant 0 : i32
    return %c0_i32, %c0_i32_0 : i32, i32
  }
  func.func @transform_3(%arg0: i32) -> (i32, i32) {
    %c0_i32 = arith.constant 0 : i32
    %c0_i32_0 = arith.constant 0 : i32
    %c0_i32_1 = arith.constant 0 : i32
    return %c0_i32, %c0_i32_0 : i32, i32
  }
  func.func @transform_4(%arg0: i32) -> (i32, i32) {
    %c0_i32 = arith.constant 0 : i32
    %c0_i32_0 = arith.constant 0 : i32
    %c0_i32_1 = arith.constant 0 : i32
    return %c0_i32, %c0_i32_0 : i32, i32
  }
  func.func @transform_5(%arg0: i32) -> (i32, i32) {
    %c0_i32 = arith.constant 0 : i32
    %c0_i32_0 = arith.constant 0 : i32
    %c0_i32_1 = arith.constant 0 : i32
    return %c0_i32, %c0_i32_0 : i32, i32
  }
  func.func @transform_6(%arg0: i32) -> (i32, i32) {
    %c0_i32 = arith.constant 0 : i32
    %c0_i32_0 = arith.constant 0 : i32
    %c0_i32_1 = arith.constant 0 : i32
    return %c0_i32, %c0_i32_0 : i32, i32
  }
  func.func @transform_7(%arg0: i32) -> (i32, i32) {
    %c0_i32 = arith.constant 0 : i32
    %c0_i32_0 = arith.constant 0 : i32
    %c0_i32_1 = arith.constant 0 : i32
    return %c0_i32, %c0_i32_0 : i32, i32
  }
  func.func @transform_8(%arg0: i32) -> (i32, i32) {
    %c0_i32 = arith.constant 0 : i32
    %c0_i32_0 = arith.constant 0 : i32
    %c0_i32_1 = arith.constant 0 : i32
    return %c0_i32, %c0_i32_0 : i32, i32
  }
  func.func @transform_9(%arg0: i32) -> (i32, i32) {
    %c0_i32 = arith.constant 0 : i32
    %c0_i32_0 = arith.constant 0 : i32
    %c0_i32_1 = arith.constant 0 : i32
    return %c0_i32, %c0_i32_0 : i32, i32
  }
  func.func @transform_10(%arg0: i32) -> (i32, i32) {
    %c0_i32 = arith.constant 0 : i32
    %c0_i32_0 = arith.constant 0 : i32
    %c0_i32_1 = arith.constant 0 : i32
    return %c0_i32, %c0_i32_0 : i32, i32
  }
  func.func @transform_11(%arg0: i32) -> (i32, i32) {
    %c0_i32 = arith.constant 0 : i32
    %c0_i32_0 = arith.constant 0 : i32
    return %arg0, %c0_i32 : i32, i32
  }
}

</mosaic_0001>

<llo_original>
// kernel: tpu_custom_call.1
$region0: #{tpu_custom_call.1}
  #allocation0 [shape = 'u32[]', space=smem, size = 0x4, offset = 0x4, fixed_abs, tag = 'smem constant byte address 0x4 - core index']
  #allocation1 [shape = 'u32[144,128]{1,0:T(1,128)}', space=vmem, size = 0x12000, scoped, tag = 'internal scratch']
  %s0 = inlined_call_operand.vmem [shape: bf16[16,896], index: 0, kind: input, shape index: {}]
  %s1 = inlined_call_operand.hbm [shape: bf16[896,512], index: 1, kind: input, shape index: {}]
  %s2 = inlined_call_operand.vmem [shape: f32[1,512], index: 2, kind: input, shape index: {}]
  %s3 = inlined_call_operand.hbm [shape: bf16[512,256], index: 3, kind: input, shape index: {}]
  %s4 = inlined_call_operand.vmem [shape: f32[1,256], index: 4, kind: input, shape index: {}]
  %s5 = inlined_call_operand.hbm [shape: bf16[256,128], index: 5, kind: input, shape index: {}]
  %s6 = inlined_call_operand.vmem [shape: f32[1,128], index: 6, kind: input, shape index: {}]
  %s7 = inlined_call_operand.vmem [shape: bf16[128,64], index: 7, kind: input, shape index: {}]
  %s8 = inlined_call_operand.vmem [shape: f32[1,64], index: 8, kind: input, shape index: {}]
  %s9 = inlined_call_operand.vmem [shape: bf16[64,128], index: 9, kind: input, shape index: {}]
  %s10 = inlined_call_operand.vmem [shape: f32[1,128], index: 10, kind: input, shape index: {}]
  %s11 = inlined_call_operand.hbm [shape: f32[16,128], index: 11, kind: output, shape index: {}]
  %s12 = sld [smem:[#allocation0]]
  $region89: #{tpu_custom_call.1} parent=0
    _
  %s14 = ssub.s32 1, %s12
  %s15 = scalar_select 0, %s14, %s12
  $region1: #{tpu_custom_call.1} parent=0
    #allocation2 [shape = 'u8[917504]{0}', space=vmem, size = 0xe0000, scoped, tag = 'input window, operand 1, single buffered']
    #allocation3 [shape = 's32[2]{0}', space=sflag, size = 0x8, scoped, tag = 'scoped memory for tpu_custom_call.1']
    #allocation4 [shape = 's32[2]{0}', space=sflag, size = 0x8, scoped, tag = 'scoped memory for tpu_custom_call.1']
    #allocation5 [shape = 'u8[262144]{0}', space=vmem, size = 0x40000, scoped, tag = 'input window, operand 3, single buffered']
    #allocation6 [shape = 's32[1]{0}', space=sflag, size = 0x4, scoped, tag = 'scoped memory for tpu_custom_call.1']
    #allocation7 [shape = 'u8[65536]{0}', space=vmem, size = 0x10000, scoped, tag = 'input window, operand 5, single buffered']
    #allocation8 [shape = 'u8[8192]{0}', space=vmem, size = 0x2000, scoped, tag = 'output window, operand 0']
    %16 = vsyncpa [#allocation3], 0
    %17 = vsyncpa [#allocation6], 0
    %18 = vsyncpa [#allocation4], 0
    %s19 = scalar_lea.sflag [#allocation4], 1
    %20 = vsyncpa %s19, 0
    loop: start=0, step=1, limit=4
    $region2: #{tpu_custom_call.1} parent=1 // loop_pre_header
      _
    $region3: #{tpu_custom_call.1} parent=1 // loop_header
      %s22 = sphi 0, %s26
      %p23 = scmp.ge.s32.totalorder %s22, 4
      %s32 = sphi 0, %s34
      %s35 = sphi 0, %s32
      %s36 = sphi 0, %s35
      %s52 = sphi 0, %s36
      %s56 = sphi 0, %s56
      %s58 = sphi 0, %s56
      %s59 = sphi 0, %s58
      %s73 = sphi 0, %s59
      %s77 = sphi 0, %s77
      %s79 = sphi 0, %s77
      %s80 = sphi 0, %s79
      %s94 = sphi 0, %s80
      %s98 = sphi 0, %s98
      %s100 = sphi 0, %s98
      %s101 = sphi 0, %s100
      %s115 = sphi 0, %s101
      %s119 = sphi 0, %s119
      %s121 = sphi 0, %s119
      %s122 = sphi 0, %s121
      %s136 = sphi 0, %s122
      %s140 = sphi 0, %s140
      %s142 = sphi 0, %s140
      %s143 = sphi 0, %s142
      %s157 = sphi 0, %s143
      %s161 = sphi 0, %s161
      %s163 = sphi 0, %s161
      %s164 = sphi 0, %s163
      %s178 = sphi 0, %s164
      %s182 = sphi 0, %s182
      %s184 = sphi 0, %s182
      %s185 = sphi 0, %s184
      %s199 = sphi 0, %s185
      %s203 = sphi 0, %s203
      %s205 = sphi 0, %s203
      %s206 = sphi 0, %s205
      %s220 = sphi 0, %s206
      %s224 = sphi 0, %s224
      %s226 = sphi 0, %s224
      %s227 = sphi 0, %s226
      %s241 = sphi 0, %s227
      %s245 = sphi 0, %s245
      %s247 = sphi 0, %s245
      %s248 = sphi 0, %s247
      %s262 = sphi 0, %s248
      %s268 = sphi 0, %s270
      %s271 = sphi 0, %s268
      %s272 = sphi 0, %s271
      %s288 = sphi 0, %s272
    $region4: #{tpu_custom_call.1} parent=1 // loop_header_branch
      %25 = sbr.rel (%p23) target = $region8
    $region5: #{tpu_custom_call.1} parent=1 // loop_body
      %s27 = ssub.s32 %s22, 1
      %s28 = ssub.s32 %s22, 2
      %s29 = sadd.s32 %s22, 1
      %s30 = ssub.s32 %s22, %s29
      %p31 = scmp.eq.s32.totalorder %s30, 0
      %s33 = sadd.s32 %s32, 1
      %s34 = scalar_select %p31, %s32, %s33
      %p37 = pneg %p31
      %p38 = scmp.eq.s32.totalorder %s22, 1
      %p39 = por %p37, %p38
      %p40 = scmp.ne.s32.totalorder %s32, %s35
      %p41 = scmp.eq.s32.totalorder %s22, 0
      %p42 = por %p40, %p41
      %p43 = scmp.ne.s32.totalorder %s32, %s35
      %p44 = scmp.eq.s32.totalorder %s27, 1
      %p45 = por %p43, %p44
      %p46 = scmp.ne.s32.totalorder %s35, %s36
      %p47 = scmp.eq.s32.totalorder %s27, 0
      %p48 = por %p46, %p47
      %p49 = scmp.ne.s32.totalorder %s35, %s36
      %p50 = scmp.eq.s32.totalorder %s28, 1
      %p51 = por %p49, %p50
      %p53 = scmp.ne.s32.totalorder %s36, %s52
      %p54 = scmp.eq.s32.totalorder %s28, 0
      %p55 = por %p53, %p54
      %s57 = sadd.s32 %s56, 1
      %p60 = scmp.eq.s32.totalorder %s22, 1
      %p61 = scmp.ne.s32.totalorder %s56, %s58
      %p62 = scmp.eq.s32.totalorder %s22, 0
      %p63 = por %p61, %p62
      %p64 = scmp.ne.s32.totalorder %s56, %s58
      %p65 = scmp.eq.s32.totalorder %s27, 1
      %p66 = por %p64, %p65
      %p67 = scmp.ne.s32.totalorder %s58, %s59
      %p68 = scmp.eq.s32.totalorder %s27, 0
      %p69 = por %p67, %p68
      %p70 = scmp.ne.s32.totalorder %s58, %s59
      %p71 = scmp.eq.s32.totalorder %s28, 1
      %p72 = por %p70, %p71
      %p74 = scmp.ne.s32.totalorder %s59, %s73
      %p75 = scmp.eq.s32.totalorder %s28, 0
      %p76 = por %p74, %p75
      %s78 = sadd.s32 %s77, 1
      %p81 = scmp.eq.s32.totalorder %s22, 1
      %p82 = scmp.ne.s32.totalorder %s77, %s79
      %p83 = scmp.eq.s32.totalorder %s22, 0
      %p84 = por %p82, %p83
      %p85 = scmp.ne.s32.totalorder %s77, %s79
      %p86 = scmp.eq.s32.totalorder %s27, 1
      %p87 = por %p85, %p86
      %p88 = scmp.ne.s32.totalorder %s79, %s80
      %p89 = scmp.eq.s32.totalorder %s27, 0
      %p90 = por %p88, %p89
      %p91 = scmp.ne.s32.totalorder %s79, %s80
      %p92 = scmp.eq.s32.totalorder %s28, 1
      %p93 = por %p91, %p92
      %p95 = scmp.ne.s32.totalorder %s80, %s94
      %p96 = scmp.eq.s32.totalorder %s28, 0
      %p97 = por %p95, %p96
      %s99 = sadd.s32 %s98, 1
      %p102 = scmp.eq.s32.totalorder %s22, 1
      %p103 = scmp.ne.s32.totalorder %s98, %s100
      %p104 = scmp.eq.s32.totalorder %s22, 0
      %p105 = por %p103, %p104
      %p106 = scmp.ne.s32.totalorder %s98, %s100
      %p107 = scmp.eq.s32.totalorder %s27, 1
      %p108 = por %p106, %p107
      %p109 = scmp.ne.s32.totalorder %s100, %s101
      %p110 = scmp.eq.s32.totalorder %s27, 0
      %p111 = por %p109, %p110
      %p112 = scmp.ne.s32.totalorder %s100, %s101
      %p113 = scmp.eq.s32.totalorder %s28, 1
      %p114 = por %p112, %p113
      %p116 = scmp.ne.s32.totalorder %s101, %s115
      %p117 = scmp.eq.s32.totalorder %s28, 0
      %p118 = por %p116, %p117
      %s120 = sadd.s32 %s119, 1
      %p123 = scmp.eq.s32.totalorder %s22, 1
      %p124 = scmp.ne.s32.totalorder %s119, %s121
      %p125 = scmp.eq.s32.totalorder %s22, 0
      %p126 = por %p124, %p125
      %p127 = scmp.ne.s32.totalorder %s119, %s121
      %p128 = scmp.eq.s32.totalorder %s27, 1
      %p129 = por %p127, %p128
      %p130 = scmp.ne.s32.totalorder %s121, %s122
      %p131 = scmp.eq.s32.totalorder %s27, 0
      %p132 = por %p130, %p131
      %p133 = scmp.ne.s32.totalorder %s121, %s122
      %p134 = scmp.eq.s32.totalorder %s28, 1
      %p135 = por %p133, %p134
      %p137 = scmp.ne.s32.totalorder %s122, %s136
      %p138 = scmp.eq.s32.totalorder %s28, 0
      %p139 = por %p137, %p138
      %s141 = sadd.s32 %s140, 1
      %p144 = scmp.eq.s32.totalorder %s22, 1
      %p145 = scmp.ne.s32.totalorder %s140, %s142
      %p146 = scmp.eq.s32.totalorder %s22, 0
      %p147 = por %p145, %p146
      %p148 = scmp.ne.s32.totalorder %s140, %s142
      %p149 = scmp.eq.s32.totalorder %s27, 1
      %p150 = por %p148, %p149
      %p151 = scmp.ne.s32.totalorder %s142, %s143
      %p152 = scmp.eq.s32.totalorder %s27, 0
      %p153 = por %p151, %p152
      %p154 = scmp.ne.s32.totalorder %s142, %s143
      %p155 = scmp.eq.s32.totalorder %s28, 1
      %p156 = por %p154, %p155
      %p158 = scmp.ne.s32.totalorder %s143, %s157
      %p159 = scmp.eq.s32.totalorder %s28, 0
      %p160 = por %p158, %p159
      %s162 = sadd.s32 %s161, 1
      %p165 = scmp.eq.s32.totalorder %s22, 1
      %p166 = scmp.ne.s32.totalorder %s161, %s163
      %p167 = scmp.eq.s32.totalorder %s22, 0
      %p168 = por %p166, %p167
      %p169 = scmp.ne.s32.totalorder %s161, %s163
      %p170 = scmp.eq.s32.totalorder %s27, 1
      %p171 = por %p169, %p170
      %p172 = scmp.ne.s32.totalorder %s163, %s164
      %p173 = scmp.eq.s32.totalorder %s27, 0
      %p174 = por %p172, %p173
      %p175 = scmp.ne.s32.totalorder %s163, %s164
      %p176 = scmp.eq.s32.totalorder %s28, 1
      %p177 = por %p175, %p176
      %p179 = scmp.ne.s32.totalorder %s164, %s178
      %p180 = scmp.eq.s32.totalorder %s28, 0
      %p181 = por %p179, %p180
      %s183 = sadd.s32 %s182, 1
      %p186 = scmp.eq.s32.totalorder %s22, 1
      %p187 = scmp.ne.s32.totalorder %s182, %s184
      %p188 = scmp.eq.s32.totalorder %s22, 0
      %p189 = por %p187, %p188
      %p190 = scmp.ne.s32.totalorder %s182, %s184
      %p191 = scmp.eq.s32.totalorder %s27, 1
      %p192 = por %p190, %p191
      %p193 = scmp.ne.s32.totalorder %s184, %s185
      %p194 = scmp.eq.s32.totalorder %s27, 0
      %p195 = por %p193, %p194
      %p196 = scmp.ne.s32.totalorder %s184, %s185
      %p197 = scmp.eq.s32.totalorder %s28, 1
      %p198 = por %p196, %p197
      %p200 = scmp.ne.s32.totalorder %s185, %s199
      %p201 = scmp.eq.s32.totalorder %s28, 0
      %p202 = por %p200, %p201
      %s204 = sadd.s32 %s203, 1
      %p207 = scmp.eq.s32.totalorder %s22, 1
      %p208 = scmp.ne.s32.totalorder %s203, %s205
      %p209 = scmp.eq.s32.totalorder %s22, 0
      %p210 = por %p208, %p209
      %p211 = scmp.ne.s32.totalorder %s203, %s205
      %p212 = scmp.eq.s32.totalorder %s27, 1
      %p213 = por %p211, %p212
      %p214 = scmp.ne.s32.totalorder %s205, %s206
      %p215 = scmp.eq.s32.totalorder %s27, 0
      %p216 = por %p214, %p215
      %p217 = scmp.ne.s32.totalorder %s205, %s206
      %p218 = scmp.eq.s32.totalorder %s28, 1
      %p219 = por %p217, %p218
      %p221 = scmp.ne.s32.totalorder %s206, %s220
      %p222 = scmp.eq.s32.totalorder %s28, 0
      %p223 = por %p221, %p222
      %s225 = sadd.s32 %s224, 1
      %p228 = scmp.eq.s32.totalorder %s22, 1
      %p229 = scmp.ne.s32.totalorder %s224, %s226
      %p230 = scmp.eq.s32.totalorder %s22, 0
      %p231 = por %p229, %p230
      %p232 = scmp.ne.s32.totalorder %s224, %s226
      %p233 = scmp.eq.s32.totalorder %s27, 1
      %p234 = por %p232, %p233
      %p235 = scmp.ne.s32.totalorder %s226, %s227
      %p236 = scmp.eq.s32.totalorder %s27, 0
      %p237 = por %p235, %p236
      %p238 = scmp.ne.s32.totalorder %s226, %s227
      %p239 = scmp.eq.s32.totalorder %s28, 1
      %p240 = por %p238, %p239
      %p242 = scmp.ne.s32.totalorder %s227, %s241
      %p243 = scmp.eq.s32.totalorder %s28, 0
      %p244 = por %p242, %p243
      %s246 = sadd.s32 %s245, 1
      %p249 = scmp.eq.s32.totalorder %s22, 1
      %p250 = scmp.ne.s32.totalorder %s245, %s247
      %p251 = scmp.eq.s32.totalorder %s22, 0
      %p252 = por %p250, %p251
      %p253 = scmp.ne.s32.totalorder %s245, %s247
      %p254 = scmp.eq.s32.totalorder %s27, 1
      %p255 = por %p253, %p254
      %p256 = scmp.ne.s32.totalorder %s247, %s248
      %p257 = scmp.eq.s32.totalorder %s27, 0
      %p258 = por %p256, %p257
      %p259 = scmp.ne.s32.totalorder %s247, %s248
      %p260 = scmp.eq.s32.totalorder %s28, 1
      %p261 = por %p259, %p260
      %p263 = scmp.ne.s32.totalorder %s248, %s262
      %p264 = scmp.eq.s32.totalorder %s28, 0
      %p265 = por %p263, %p264
      %s266 = ssub.s32 %s22, %s29
      %p267 = scmp.eq.s32.totalorder %s266, 0
      %s269 = sadd.s32 %s268, 1
      %s270 = scalar_select %p267, %s268, %s269
      %p273 = pneg %p267
      %p274 = scmp.eq.s32.totalorder %s22, 1
      %p275 = por %p273, %p274
      %p276 = scmp.ne.s32.totalorder %s268, %s271
      %p277 = scmp.eq.s32.totalorder %s22, 0
      %p278 = por %p276, %p277
      %p279 = scmp.ne.s32.totalorder %s268, %s271
      %p280 = scmp.eq.s32.totalorder %s27, 1
      %p281 = por %p279, %p280
      %p282 = scmp.ne.s32.totalorder %s271, %s272
      %p283 = scmp.eq.s32.totalorder %s27, 0
      %p284 = por %p282, %p283
      %p285 = scmp.ne.s32.totalorder %s271, %s272
      %p286 = scmp.eq.s32.totalorder %s28, 1
      %p287 = por %p285, %p286
      %p289 = scmp.ne.s32.totalorder %s272, %s288
      %p290 = scmp.eq.s32.totalorder %s28, 0
      %p291 = por %p289, %p290
      %p292 = scmp.le.s32.totalorder 1, %s22
      %p293 = scmp.lt.s32.totalorder %s22, 3
      %p294 = pnand %p292, %p293
      %p295 = pneg %p294
      // Predicated region
      $region9: #{tpu_custom_call.1} parent=5 // pred_check
        _
      $region10: #{tpu_custom_call.1} parent=5 // pred_check_branch
        %297 = sbr.rel (%p294) target = $region12
      $region11: #{tpu_custom_call.1} parent=5 // pred_region
        %s298 = ssub.s32 %s22, 1
        // Predicated region
        $region13: #{tpu_custom_call.1} parent=11 // pred_check
          %p299 = pneg %p69
        $region14: #{tpu_custom_call.1} parent=11 // pred_check_branch
          %301 = sbr.rel (%p299) target = $region16
        $region15: #{tpu_custom_call.1} parent=11 // pred_region
          %s303 = ssub.s32 28672, 28672
          %304 = vsyncadd [#allocation3], %s303
          %s305 = sshll.u32 [#allocation2], 4
          %s306 = int_to_ptr.vmem [resolvable:$true] %s305
          %311 = dma.hbm_to_vmem [thread:$0]  %s1, 28672, %s306, [#allocation3], 256, 256, 16
        $region16: #{tpu_custom_call.1} parent=11 // pred_fallthru
          _
        // Predicated region
        $region17: #{tpu_custom_call.1} parent=11 // pred_check
          %p312 = pneg %p90
        $region18: #{tpu_custom_call.1} parent=11 // pred_check_branch
          %314 = sbr.rel (%p312) target = $region20
        $region19: #{tpu_custom_call.1} parent=11 // pred_region
          _
        $region20: #{tpu_custom_call.1} parent=11 // pred_fallthru
          _
        // Predicated region
        $region21: #{tpu_custom_call.1} parent=11 // pred_check
          %p315 = pneg %p111
        $region22: #{tpu_custom_call.1} parent=11 // pred_check_branch
          %317 = sbr.rel (%p315) target = $region24
        $region23: #{tpu_custom_call.1} parent=11 // pred_region
          %s319 = ssub.s32 8192, 8192
          %320 = vsyncadd [#allocation6], %s319
          %s321 = sshll.u32 [#allocation5], 4
          %s322 = int_to_ptr.vmem [resolvable:$true] %s321
          %327 = dma.hbm_to_vmem [thread:$0]  %s3, 8192, %s322, [#allocation6], 128, 128, 8
        $region24: #{tpu_custom_call.1} parent=11 // pred_fallthru
          _
        // Predicated region
        $region25: #{tpu_custom_call.1} parent=11 // pred_check
          %p328 = pneg %p132
        $region26: #{tpu_custom_call.1} parent=11 // pred_check_branch
          %330 = sbr.rel (%p328) target = $region28
        $region27: #{tpu_custom_call.1} parent=11 // pred_region
          _
        $region28: #{tpu_custom_call.1} parent=11 // pred_fallthru
          _
        // Predicated region
        $region29: #{tpu_custom_call.1} parent=11 // pred_check
          %p331 = pneg %p153
        $region30: #{tpu_custom_call.1} parent=11 // pred_check_branch
          %333 = sbr.rel (%p331) target = $region32
        $region31: #{tpu_custom_call.1} parent=11 // pred_region
          %s335 = ssub.s32 2048, 2048
          %336 = vsyncadd [#allocation6], %s335
          %s337 = sshll.u32 [#allocation7], 4
          %s338 = int_to_ptr.vmem [resolvable:$true] %s337
          %343 = dma.hbm_to_vmem [thread:$0]  %s5, 2048, %s338, [#allocation6], 64, 64, 4
        $region32: #{tpu_custom_call.1} parent=11 // pred_fallthru
          _
        // Predicated region
        $region33: #{tpu_custom_call.1} parent=11 // pred_check
          %p344 = pneg %p174
        $region34: #{tpu_custom_call.1} parent=11 // pred_check_branch
          %346 = sbr.rel (%p344) target = $region36
        $region35: #{tpu_custom_call.1} parent=11 // pred_region
          _
        $region36: #{tpu_custom_call.1} parent=11 // pred_fallthru
          _
        // Predicated region
        $region37: #{tpu_custom_call.1} parent=11 // pred_check
          %p347 = pneg %p195
        $region38: #{tpu_custom_call.1} parent=11 // pred_check_branch
          %349 = sbr.rel (%p347) target = $region40
        $region39: #{tpu_custom_call.1} parent=11 // pred_region
          _
        $region40: #{tpu_custom_call.1} parent=11 // pred_fallthru
          _
        // Predicated region
        $region41: #{tpu_custom_call.1} parent=11 // pred_check
          %p350 = pneg %p216
        $region42: #{tpu_custom_call.1} parent=11 // pred_check_branch
          %352 = sbr.rel (%p350) target = $region44
        $region43: #{tpu_custom_call.1} parent=11 // pred_region
          _
        $region44: #{tpu_custom_call.1} parent=11 // pred_fallthru
          _
        // Predicated region
        $region45: #{tpu_custom_call.1} parent=11 // pred_check
          %p353 = pneg %p237
        $region46: #{tpu_custom_call.1} parent=11 // pred_check_branch
          %355 = sbr.rel (%p353) target = $region48
        $region47: #{tpu_custom_call.1} parent=11 // pred_region
          _
        $region48: #{tpu_custom_call.1} parent=11 // pred_fallthru
          _
        // Predicated region
        $region49: #{tpu_custom_call.1} parent=11 // pred_check
          %p356 = pneg %p258
        $region50: #{tpu_custom_call.1} parent=11 // pred_check_branch
          %358 = sbr.rel (%p356) target = $region52
        $region51: #{tpu_custom_call.1} parent=11 // pred_region
          _
        $region52: #{tpu_custom_call.1} parent=11 // pred_fallthru
          _
      $region12: #{tpu_custom_call.1} parent=5 // pred_fallthru
        _
      %p359 = scmp.lt.s32.totalorder %s22, 2
      // Predicated region
      $region53: #{tpu_custom_call.1} parent=5 // pred_check
        %p360 = pneg %p359
      $region54: #{tpu_custom_call.1} parent=5 // pred_check_branch
        %362 = sbr.rel (%p360) target = $region56
      $region55: #{tpu_custom_call.1} parent=5 // pred_region
        // Predicated region
        $region57: #{tpu_custom_call.1} parent=55 // pred_check
          %p363 = pneg %p42
        $region58: #{tpu_custom_call.1} parent=55 // pred_check_branch
          %365 = sbr.rel (%p363) target = $region60
        $region59: #{tpu_custom_call.1} parent=55 // pred_region
          %p366 = scmp.lt.s32.totalorder %s22, 1
          %s367 = scalar_select %p366, %s22, 1
          %s368 = smul.addr %s367, 7
          %s369 = smul.addr %s368, 4
          %s370 = scalar_lea.vmem %s0, %s369
        $region60: #{tpu_custom_call.1} parent=55 // pred_fallthru
          _
      $region56: #{tpu_custom_call.1} parent=5 // pred_fallthru
        _
      %p371 = scmp.le.s32.totalorder 1, %s22
      %p372 = scmp.lt.s32.totalorder %s22, 3
      %p373 = pnand %p371, %p372
      %p374 = pneg %p373
      // Predicated region
      $region61: #{tpu_custom_call.1} parent=5 // pred_check
        _
      $region62: #{tpu_custom_call.1} parent=5 // pred_check_branch
        %376 = sbr.rel (%p373) target = $region64
      $region63: #{tpu_custom_call.1} parent=5 // pred_region
        %s377 = ssub.s32 %s22, 1
        // Predicated region
        $region65: #{tpu_custom_call.1} parent=63 // pred_check
          %p378 = pneg %p69
        $region66: #{tpu_custom_call.1} parent=63 // pred_check_branch
          %380 = sbr.rel (%p378) target = $region68
        $region67: #{tpu_custom_call.1} parent=63 // pred_region
          %381 = dma.done [#allocation3], 28672
        $region68: #{tpu_custom_call.1} parent=63 // pred_fallthru
          _
        // Predicated region
        $region69: #{tpu_custom_call.1} parent=63 // pred_check
          %p382 = pneg %p111
        $region70: #{tpu_custom_call.1} parent=63 // pred_check_branch
          %384 = sbr.rel (%p382) target = $region72
        $region71: #{tpu_custom_call.1} parent=63 // pred_region
          %385 = dma.done [#allocation6], 8192
        $region72: #{tpu_custom_call.1} parent=63 // pred_fallthru
          _
        // Predicated region
        $region73: #{tpu_custom_call.1} parent=63 // pred_check
          %p386 = pneg %p153
        $region74: #{tpu_custom_call.1} parent=63 // pred_check_branch
          %388 = sbr.rel (%p386) target = $region76
        $region75: #{tpu_custom_call.1} parent=63 // pred_region
          %389 = dma.done [#allocation6], 2048
        $region76: #{tpu_custom_call.1} parent=63 // pred_fallthru
          _
        %p390 = scmp.lt.s32.totalorder %s27, 1
        %s391 = scalar_select %p390, %s27, 1
        %s392 = smul.addr %s391, 7
        %s393 = smul.addr %s392, 4
        %s394 = scalar_lea.vmem %s0, %s393
        %p395 = pneg %p48
        %p396 = pneg %p45
        %p397 = pneg %p69
        %p398 = pneg %p66
        %p399 = pneg %p90
        %p400 = pneg %p87
        %p401 = pneg %p111
        %p402 = pneg %p108
        %p403 = pneg %p132
        %p404 = pneg %p129
        %p405 = pneg %p153
        %p406 = pneg %p150
        %p407 = pneg %p174
        %p408 = pneg %p171
        %p409 = pneg %p195
        %p410 = pneg %p192
        %p411 = pneg %p216
        %p412 = pneg %p213
        %p413 = pneg %p237
        %p414 = pneg %p234
        %p415 = pneg %p258
        %p416 = pneg %p255
        %p417 = pneg %p284
        %p418 = pneg %p281
        %s419 = sand.u32 %s271, 1
        %s420 = scalar_lea.sflag [#allocation4], %s419
        %s421 = sand.u32 %s271, 1
        %s422 = smul.addr %s421, 8
        %s423 = scalar_lea.vmem [#allocation8], %s422
        %p424 = scmp.lt.s32.totalorder %s27, 1
        %s425 = scalar_select %p424, %s27, 1
        %s426 = smul.addr %s425, 7
        %s427 = smul.addr %s426, 4
        %s428 = scalar_lea.vmem %s0, %s427
        %v430 = vld [vmem:[%s428] sm:$0xff]
        %v431 = vld [vmem:[%s428 + $0x8] sm:$0xff]
        %v432 = vld [vmem:[%s428 + $0x10] sm:$0xff]
        %v433 = vld [vmem:[%s428 + $0x18] sm:$0xf]
        %v434 = vld [vmem:[#allocation2] sm:$0xff]
        %v435 = vld [vmem:[#allocation2 + $0x8] sm:$0xff]
        %v436 = vld [vmem:[#allocation2 + $0x10] sm:$0xff]
        %v437 = vld [vmem:[#allocation2 + $0x18] sm:$0xff]
        %v438 = vld [vmem:[#allocation2 + $0x20] sm:$0xff]
        %v439 = vld [vmem:[#allocation2 + $0x28] sm:$0xff]
        %v440 = vld [vmem:[#allocation2 + $0x30] sm:$0xff]
        %v441 = vld [vmem:[#allocation2 + $0x38] sm:$0xff]
        %v442 = vld [vmem:[#allocation2 + $0x40] sm:$0xff]
        %v443 = vld [vmem:[#allocation2 + $0x48] sm:$0xff]
        %v444 = vld [vmem:[#allocation2 + $0x50] sm:$0xff]
        %v445 = vld [vmem:[#allocation2 + $0x58] sm:$0xff]
        %v446 = vld [vmem:[#allocation2 + $0x60] sm:$0xff]
        %v447 = vld [vmem:[#allocation2 + $0x68] sm:$0xff]
        %v448 = vld [vmem:[#allocation2 + $0x70] sm:$0xff]
        %v449 = vld [vmem:[#allocation2 + $0x78] sm:$0xff]
        %v450 = vld [vmem:[#allocation2 + $0x80] sm:$0xff]
        %v451 = vld [vmem:[#allocation2 + $0x88] sm:$0xff]
        %v452 = vld [vmem:[#allocation2 + $0x90] sm:$0xff]
        %v453 = vld [vmem:[#allocation2 + $0x98] sm:$0xff]
        %v454 = vld [vmem:[#allocation2 + $0xa0] sm:$0xff]
        %v455 = vld [vmem:[#allocation2 + $0xa8] sm:$0xff]
        %v456 = vld [vmem:[#allocation2 + $0xb0] sm:$0xff]
        %v457 = vld [vmem:[#allocation2 + $0xb8] sm:$0xff]
        %v458 = vld [vmem:[#allocation2 + $0xc0] sm:$0xff]
        %v459 = vld [vmem:[#allocation2 + $0xc8] sm:$0xff]
        %v460 = vld [vmem:[#allocation2 + $0xd0] sm:$0xff]
        %v461 = vld [vmem:[#allocation2 + $0xd8] sm:$0xff]
        %v462 = vld [vmem:[#allocation2 + $0xe0] sm:$0xff]
        %v463 = vld [vmem:[#allocation2 + $0xe8] sm:$0xff]
        %v464 = vld [vmem:[#allocation2 + $0xf0] sm:$0xff]
        %v465 = vld [vmem:[#allocation2 + $0xf8] sm:$0xff]
        %v466 = vld [vmem:[#allocation2 + $0x100] sm:$0xff]
        %v467 = vld [vmem:[#allocation2 + $0x108] sm:$0xff]
        %v468 = vld [vmem:[#allocation2 + $0x110] sm:$0xff]
        %v469 = vld [vmem:[#allocation2 + $0x118] sm:$0xff]
        %v470 = vld [vmem:[#allocation2 + $0x120] sm:$0xff]
        %v471 = vld [vmem:[#allocation2 + $0x128] sm:$0xff]
        %v472 = vld [vmem:[#allocation2 + $0x130] sm:$0xff]
        %v473 = vld [vmem:[#allocation2 + $0x138] sm:$0xff]
        %v474 = vld [vmem:[#allocation2 + $0x140] sm:$0xff]
        %v475 = vld [vmem:[#allocation2 + $0x148] sm:$0xff]
        %v476 = vld [vmem:[#allocation2 + $0x150] sm:$0xff]
        %v477 = vld [vmem:[#allocation2 + $0x158] sm:$0xff]
        %v478 = vld [vmem:[#allocation2 + $0x160] sm:$0xff]
        %v479 = vld [vmem:[#allocation2 + $0x168] sm:$0xff]
        %v480 = vld [vmem:[#allocation2 + $0x170] sm:$0xff]
        %v481 = vld [vmem:[#allocation2 + $0x178] sm:$0xff]
        %v482 = vld [vmem:[#allocation2 + $0x180] sm:$0xff]
        %v483 = vld [vmem:[#allocation2 + $0x188] sm:$0xff]
        %v484 = vld [vmem:[#allocation2 + $0x190] sm:$0xff]
        %v485 = vld [vmem:[#allocation2 + $0x198] sm:$0xff]
        %v486 = vld [vmem:[#allocation2 + $0x1a0] sm:$0xff]
        %v487 = vld [vmem:[#allocation2 + $0x1a8] sm:$0xff]
        %v488 = vld [vmem:[#allocation2 + $0x1b0] sm:$0xff]
        %v489 = vld [vmem:[#allocation2 + $0x1b8] sm:$0xff]
        %v490 = vld [vmem:[#allocation2 + $0x1c0] sm:$0xff]
        %v491 = vld [vmem:[#allocation2 + $0x1c8] sm:$0xff]
        %v492 = vld [vmem:[#allocation2 + $0x1d0] sm:$0xff]
        %v493 = vld [vmem:[#allocation2 + $0x1d8] sm:$0xff]
        %v494 = vld [vmem:[#allocation2 + $0x1e0] sm:$0xff]
        %v495 = vld [vmem:[#allocation2 + $0x1e8] sm:$0xff]
        %v496 = vld [vmem:[#allocation2 + $0x1f0] sm:$0xff]
        %v497 = vld [vmem:[#allocation2 + $0x1f8] sm:$0xff]
        %v498 = vld [vmem:[#allocation2 + $0x200] sm:$0xff]
        %v499 = vld [vmem:[#allocation2 + $0x208] sm:$0xff]
        %v500 = vld [vmem:[#allocation2 + $0x210] sm:$0xff]
        %v501 = vld [vmem:[#allocation2 + $0x218] sm:$0xff]
        %v502 = vld [vmem:[#allocation2 + $0x220] sm:$0xff]
        %v503 = vld [vmem:[#allocation2 + $0x228] sm:$0xff]
        %v504 = vld [vmem:[#allocation2 + $0x230] sm:$0xff]
        %v505 = vld [vmem:[#allocation2 + $0x238] sm:$0xff]
        %v506 = vld [vmem:[#allocation2 + $0x240] sm:$0xff]
        %v507 = vld [vmem:[#allocation2 + $0x248] sm:$0xff]
        %v508 = vld [vmem:[#allocation2 + $0x250] sm:$0xff]
        %v509 = vld [vmem:[#allocation2 + $0x258] sm:$0xff]
        %v510 = vld [vmem:[#allocation2 + $0x260] sm:$0xff]
        %v511 = vld [vmem:[#allocation2 + $0x268] sm:$0xff]
        %v512 = vld [vmem:[#allocation2 + $0x270] sm:$0xff]
        %v513 = vld [vmem:[#allocation2 + $0x278] sm:$0xff]
        %v514 = vld [vmem:[#allocation2 + $0x280] sm:$0xff]
        %v515 = vld [vmem:[#allocation2 + $0x288] sm:$0xff]
        %v516 = vld [vmem:[#allocation2 + $0x290] sm:$0xff]
        %v517 = vld [vmem:[#allocation2 + $0x298] sm:$0xff]
        %v518 = vld [vmem:[#allocation2 + $0x2a0] sm:$0xff]
        %v519 = vld [vmem:[#allocation2 + $0x2a8] sm:$0xff]
        %v520 = vld [vmem:[#allocation2 + $0x2b0] sm:$0xff]
        %v521 = vld [vmem:[#allocation2 + $0x2b8] sm:$0xff]
        %v522 = vld [vmem:[#allocation2 + $0x2c0] sm:$0xff]
        %v523 = vld [vmem:[#allocation2 + $0x2c8] sm:$0xff]
        %v524 = vld [vmem:[#allocation2 + $0x2d0] sm:$0xff]
        %v525 = vld [vmem:[#allocation2 + $0x2d8] sm:$0xff]
        %v526 = vld [vmem:[#allocation2 + $0x2e0] sm:$0xff]
        %v527 = vld [vmem:[#allocation2 + $0x2e8] sm:$0xff]
        %v528 = vld [vmem:[#allocation2 + $0x2f0] sm:$0xff]
        %v529 = vld [vmem:[#allocation2 + $0x2f8] sm:$0xff]
        %v530 = vld [vmem:[#allocation2 + $0x300] sm:$0xff]
        %v531 = vld [vmem:[#allocation2 + $0x308] sm:$0xff]
        %v532 = vld [vmem:[#allocation2 + $0x310] sm:$0xff]
        %v533 = vld [vmem:[#allocation2 + $0x318] sm:$0xff]
        %v534 = vld [vmem:[#allocation2 + $0x320] sm:$0xff]
        %v535 = vld [vmem:[#allocation2 + $0x328] sm:$0xff]
        %v536 = vld [vmem:[#allocation2 + $0x330] sm:$0xff]
        %v537 = vld [vmem:[#allocation2 + $0x338] sm:$0xff]
        %v538 = vld [vmem:[#allocation2 + $0x340] sm:$0xff]
        %v539 = vld [vmem:[#allocation2 + $0x348] sm:$0xff]
        %v540 = vld [vmem:[#allocation2 + $0x350] sm:$0xff]
        %v541 = vld [vmem:[#allocation2 + $0x358] sm:$0xff]
        %v542 = vld [vmem:[#allocation2 + $0x360] sm:$0xff]
        %v543 = vld [vmem:[#allocation2 + $0x368] sm:$0xff]
        %v544 = vld [vmem:[#allocation2 + $0x370] sm:$0xff]
        %v545 = vld [vmem:[#allocation2 + $0x378] sm:$0xff]
        %v546 = vld [vmem:[#allocation2 + $0x380] sm:$0xff]
        %v547 = vld [vmem:[#allocation2 + $0x388] sm:$0xff]
        %v548 = vld [vmem:[#allocation2 + $0x390] sm:$0xff]
        %v549 = vld [vmem:[#allocation2 + $0x398] sm:$0xff]
        %v550 = vld [vmem:[#allocation2 + $0x3a0] sm:$0xff]
        %v551 = vld [vmem:[#allocation2 + $0x3a8] sm:$0xff]
        %v552 = vld [vmem:[#allocation2 + $0x3b0] sm:$0xff]
        %v553 = vld [vmem:[#allocation2 + $0x3b8] sm:$0xff]
        %v554 = vld [vmem:[#allocation2 + $0x3c0] sm:$0xff]
        %v555 = vld [vmem:[#allocation2 + $0x3c8] sm:$0xff]
        %v556 = vld [vmem:[#allocation2 + $0x3d0] sm:$0xff]
        %v557 = vld [vmem:[#allocation2 + $0x3d8] sm:$0xff]
        %v558 = vld [vmem:[#allocation2 + $0x3e0] sm:$0xff]
        %v559 = vld [vmem:[#allocation2 + $0x3e8] sm:$0xff]
        %v560 = vld [vmem:[#allocation2 + $0x3f0] sm:$0xff]
        %v561 = vld [vmem:[#allocation2 + $0x3f8] sm:$0xff]
        %v562 = vld [vmem:[#allocation2 + $0x400] sm:$0xff]
        %v563 = vld [vmem:[#allocation2 + $0x408] sm:$0xff]
        %v564 = vld [vmem:[#allocation2 + $0x410] sm:$0xff]
        %v565 = vld [vmem:[#allocation2 + $0x418] sm:$0xff]
        %v566 = vld [vmem:[#allocation2 + $0x420] sm:$0xff]
        %v567 = vld [vmem:[#allocation2 + $0x428] sm:$0xff]
        %v568 = vld [vmem:[#allocation2 + $0x430] sm:$0xff]
        %v569 = vld [vmem:[#allocation2 + $0x438] sm:$0xff]
        %v570 = vld [vmem:[#allocation2 + $0x440] sm:$0xff]
        %v571 = vld [vmem:[#allocation2 + $0x448] sm:$0xff]
        %v572 = vld [vmem:[#allocation2 + $0x450] sm:$0xff]
        %v573 = vld [vmem:[#allocation2 + $0x458] sm:$0xff]
        %v574 = vld [vmem:[#allocation2 + $0x460] sm:$0xff]
        %v575 = vld [vmem:[#allocation2 + $0x468] sm:$0xff]
        %v576 = vld [vmem:[#allocation2 + $0x470] sm:$0xff]
        %v577 = vld [vmem:[#allocation2 + $0x478] sm:$0xff]
        %v578 = vld [vmem:[#allocation2 + $0x480] sm:$0xff]
        %v579 = vld [vmem:[#allocation2 + $0x488] sm:$0xff]
        %v580 = vld [vmem:[#allocation2 + $0x490] sm:$0xff]
        %v581 = vld [vmem:[#allocation2 + $0x498] sm:$0xff]
        %v582 = vld [vmem:[#allocation2 + $0x4a0] sm:$0xff]
        %v583 = vld [vmem:[#allocation2 + $0x4a8] sm:$0xff]
        %v584 = vld [vmem:[#allocation2 + $0x4b0] sm:$0xff]
        %v585 = vld [vmem:[#allocation2 + $0x4b8] sm:$0xff]
        %v586 = vld [vmem:[#allocation2 + $0x4c0] sm:$0xff]
        %v587 = vld [vmem:[#allocation2 + $0x4c8] sm:$0xff]
        %v588 = vld [vmem:[#allocation2 + $0x4d0] sm:$0xff]
        %v589 = vld [vmem:[#allocation2 + $0x4d8] sm:$0xff]
        %v590 = vld [vmem:[#allocation2 + $0x4e0] sm:$0xff]
        %v591 = vld [vmem:[#allocation2 + $0x4e8] sm:$0xff]
        %v592 = vld [vmem:[#allocation2 + $0x4f0] sm:$0xff]
        %v593 = vld [vmem:[#allocation2 + $0x4f8] sm:$0xff]
        %v594 = vld [vmem:[#allocation2 + $0x500] sm:$0xff]
        %v595 = vld [vmem:[#allocation2 + $0x508] sm:$0xff]
        %v596 = vld [vmem:[#allocation2 + $0x510] sm:$0xff]
        %v597 = vld [vmem:[#allocation2 + $0x518] sm:$0xff]
        %v598 = vld [vmem:[#allocation2 + $0x520] sm:$0xff]
        %v599 = vld [vmem:[#allocation2 + $0x528] sm:$0xff]
        %v600 = vld [vmem:[#allocation2 + $0x530] sm:$0xff]
        %v601 = vld [vmem:[#allocation2 + $0x538] sm:$0xff]
        %v602 = vld [vmem:[#allocation2 + $0x540] sm:$0xff]
        %v603 = vld [vmem:[#allocation2 + $0x548] sm:$0xff]
        %v604 = vld [vmem:[#allocation2 + $0x550] sm:$0xff]
        %v605 = vld [vmem:[#allocation2 + $0x558] sm:$0xff]
        %v606 = vld [vmem:[#allocation2 + $0x560] sm:$0xff]
        %v607 = vld [vmem:[#allocation2 + $0x568] sm:$0xff]
        %v608 = vld [vmem:[#allocation2 + $0x570] sm:$0xff]
        %v609 = vld [vmem:[#allocation2 + $0x578] sm:$0xff]
        %v610 = vld [vmem:[#allocation2 + $0x580] sm:$0xff]
        %v611 = vld [vmem:[#allocation2 + $0x588] sm:$0xff]
        %v612 = vld [vmem:[#allocation2 + $0x590] sm:$0xff]
        %v613 = vld [vmem:[#allocation2 + $0x598] sm:$0xff]
        %v614 = vld [vmem:[#allocation2 + $0x5a0] sm:$0xff]
        %v615 = vld [vmem:[#allocation2 + $0x5a8] sm:$0xff]
        %v616 = vld [vmem:[#allocation2 + $0x5b0] sm:$0xff]
        %v617 = vld [vmem:[#allocation2 + $0x5b8] sm:$0xff]
        %v618 = vld [vmem:[#allocation2 + $0x5c0] sm:$0xff]
        %v619 = vld [vmem:[#allocation2 + $0x5c8] sm:$0xff]
        %v620 = vld [vmem:[#allocation2 + $0x5d0] sm:$0xff]
        %v621 = vld [vmem:[#allocation2 + $0x5d8] sm:$0xff]
        %v622 = vld [vmem:[#allocation2 + $0x5e0] sm:$0xff]
        %v623 = vld [vmem:[#allocation2 + $0x5e8] sm:$0xff]
        %v624 = vld [vmem:[#allocation2 + $0x5f0] sm:$0xff]
        %v625 = vld [vmem:[#allocation2 + $0x5f8] sm:$0xff]
        %v626 = vld [vmem:[#allocation2 + $0x600] sm:$0xff]
        %v627 = vld [vmem:[#allocation2 + $0x608] sm:$0xff]
        %v628 = vld [vmem:[#allocation2 + $0x610] sm:$0xff]
        %v629 = vld [vmem:[#allocation2 + $0x618] sm:$0xff]
        %v630 = vld [vmem:[#allocation2 + $0x620] sm:$0xff]
        %v631 = vld [vmem:[#allocation2 + $0x628] sm:$0xff]
        %v632 = vld [vmem:[#allocation2 + $0x630] sm:$0xff]
        %v633 = vld [vmem:[#allocation2 + $0x638] sm:$0xff]
        %v634 = vld [vmem:[#allocation2 + $0x640] sm:$0xff]
        %v635 = vld [vmem:[#allocation2 + $0x648] sm:$0xff]
        %v636 = vld [vmem:[#allocation2 + $0x650] sm:$0xff]
        %v637 = vld [vmem:[#allocation2 + $0x658] sm:$0xff]
        %v638 = vld [vmem:[#allocation2 + $0x660] sm:$0xff]
        %v639 = vld [vmem:[#allocation2 + $0x668] sm:$0xff]
        %v640 = vld [vmem:[#allocation2 + $0x670] sm:$0xff]
        %v641 = vld [vmem:[#allocation2 + $0x678] sm:$0xff]
        %v642 = vld [vmem:[#allocation2 + $0x680] sm:$0xff]
        %v643 = vld [vmem:[#allocation2 + $0x688] sm:$0xff]
        %v644 = vld [vmem:[#allocation2 + $0x690] sm:$0xff]
        %v645 = vld [vmem:[#allocation2 + $0x698] sm:$0xff]
        %v646 = vld [vmem:[#allocation2 + $0x6a0] sm:$0xff]
        %v647 = vld [vmem:[#allocation2 + $0x6a8] sm:$0xff]
        %v648 = vld [vmem:[#allocation2 + $0x6b0] sm:$0xff]
        %v649 = vld [vmem:[#allocation2 + $0x6b8] sm:$0xff]
        %v650 = vld [vmem:[#allocation2 + $0x6c0] sm:$0xff]
        %v651 = vld [vmem:[#allocation2 + $0x6c8] sm:$0xff]
        %v652 = vld [vmem:[#allocation2 + $0x6d0] sm:$0xff]
        %v653 = vld [vmem:[#allocation2 + $0x6d8] sm:$0xff]
        %v654 = vld [vmem:[#allocation2 + $0x6e0] sm:$0xff]
        %v655 = vld [vmem:[#allocation2 + $0x6e8] sm:$0xff]
        %v656 = vld [vmem:[#allocation2 + $0x6f0] sm:$0xff]
        %v657 = vld [vmem:[#allocation2 + $0x6f8] sm:$0xff]
        %v658 = vld [vmem:[%s2] sm:$0xf]
        %v660 = vlaneseq
        %v661 = vshrl.u32 %v660, 7
        %v662 = vsub.s32 0, %v661
        %v663 = vrot.slane %v658, %v662
        %v664 = vlaneseq
        %v665 = vshrl.u32 %v664, 7
        %v666 = vsub.s32 1, %v665
        %v667 = vrot.slane %v658, %v666
        %v668 = vlaneseq
        %v669 = vshrl.u32 %v668, 7
        %v670 = vsub.s32 2, %v669
        %v671 = vrot.slane %v658, %v670
        %v672 = vlaneseq
        %v673 = vshrl.u32 %v672, 7
        %v674 = vsub.s32 3, %v673
        %v675 = vrot.slane %v658, %v674
        %v684 = vunpack.c.l.b16 %v430
        %v685 = vunpack.c.h.b16 %v430
        %v686 = vunpack.c.l.b16 %v431
        %v687 = vunpack.c.h.b16 %v431
        %v688 = vunpack.c.l.b16 %v432
        %v689 = vunpack.c.h.b16 %v432
        %v690 = vunpack.c.l.b16 %v433
        %v691 = vpack.c.b16 %v684, %v684
        %v692 = vpack.c.b16 %v685, %v685
        %v693 = vpack.c.b16 %v686, %v686
        %v694 = vpack.c.b16 %v687, %v687
        %v695 = vpack.c.b16 %v688, %v688
        %v696 = vpack.c.b16 %v689, %v689
        %v697 = vpack.c.b16 %v690, %v690
        %v929 = vunpack.c.l.b16 %v434
        %v930 = vunpack.c.h.b16 %v434
        %v931 = vunpack.c.l.b16 %v435
        %v932 = vunpack.c.h.b16 %v435
        %v933 = vunpack.c.l.b16 %v436
        %v934 = vunpack.c.h.b16 %v436
        %v935 = vunpack.c.l.b16 %v437
        %v936 = vunpack.c.h.b16 %v437
        %v937 = vunpack.c.l.b16 %v438
        %v938 = vunpack.c.h.b16 %v438
        %v939 = vunpack.c.l.b16 %v439
        %v940 = vunpack.c.h.b16 %v439
        %v941 = vunpack.c.l.b16 %v440
        %v942 = vunpack.c.h.b16 %v440
        %v943 = vunpack.c.l.b16 %v441
        %v944 = vunpack.c.h.b16 %v441
        %v945 = vunpack.c.l.b16 %v442
        %v946 = vunpack.c.h.b16 %v442
        %v947 = vunpack.c.l.b16 %v443
        %v948 = vunpack.c.h.b16 %v443
        %v949 = vunpack.c.l.b16 %v444
        %v950 = vunpack.c.h.b16 %v444
        %v951 = vunpack.c.l.b16 %v445
        %v952 = vunpack.c.h.b16 %v445
        %v953 = vunpack.c.l.b16 %v446
        %v954 = vunpack.c.h.b16 %v446
        %v955 = vunpack.c.l.b16 %v447
        %v956 = vunpack.c.h.b16 %v447
        %v957 = vunpack.c.l.b16 %v448
        %v958 = vunpack.c.h.b16 %v448
        %v959 = vunpack.c.l.b16 %v449
        %v960 = vunpack.c.h.b16 %v449
        %v961 = vunpack.c.l.b16 %v450
        %v962 = vunpack.c.h.b16 %v450
        %v963 = vunpack.c.l.b16 %v451
        %v964 = vunpack.c.h.b16 %v451
        %v965 = vunpack.c.l.b16 %v452
        %v966 = vunpack.c.h.b16 %v452
        %v967 = vunpack.c.l.b16 %v453
        %v968 = vunpack.c.h.b16 %v453
        %v969 = vunpack.c.l.b16 %v454
        %v970 = vunpack.c.h.b16 %v454
        %v971 = vunpack.c.l.b16 %v455
        %v972 = vunpack.c.h.b16 %v455
        %v973 = vunpack.c.l.b16 %v456
        %v974 = vunpack.c.h.b16 %v456
        %v975 = vunpack.c.l.b16 %v457
        %v976 = vunpack.c.h.b16 %v457
        %v977 = vunpack.c.l.b16 %v458
        %v978 = vunpack.c.h.b16 %v458
        %v979 = vunpack.c.l.b16 %v459
        %v980 = vunpack.c.h.b16 %v459
        %v981 = vunpack.c.l.b16 %v460
        %v982 = vunpack.c.h.b16 %v460
        %v983 = vunpack.c.l.b16 %v461
        %v984 = vunpack.c.h.b16 %v461
        %v985 = vunpack.c.l.b16 %v462
        %v986 = vunpack.c.h.b16 %v462
        %v987 = vunpack.c.l.b16 %v463
        %v988 = vunpack.c.h.b16 %v463
        %v989 = vunpack.c.l.b16 %v464
        %v990 = vunpack.c.h.b16 %v464
        %v991 = vunpack.c.l.b16 %v465
        %v992 = vunpack.c.h.b16 %v465
        %v993 = vunpack.c.l.b16 %v466
        %v994 = vunpack.c.h.b16 %v466
        %v995 = vunpack.c.l.b16 %v467
        %v996 = vunpack.c.h.b16 %v467
        %v997 = vunpack.c.l.b16 %v468
        %v998 = vunpack.c.h.b16 %v468
        %v999 = vunpack.c.l.b16 %v469
        %v1000 = vunpack.c.h.b16 %v469
        %v1001 = vunpack.c.l.b16 %v470
        %v1002 = vunpack.c.h.b16 %v470
        %v1003 = vunpack.c.l.b16 %v471
        %v1004 = vunpack.c.h.b16 %v471
        %v1005 = vunpack.c.l.b16 %v472
        %v1006 = vunpack.c.h.b16 %v472
        %v1007 = vunpack.c.l.b16 %v473
        %v1008 = vunpack.c.h.b16 %v473
        %v1009 = vunpack.c.l.b16 %v474
        %v1010 = vunpack.c.h.b16 %v474
        %v1011 = vunpack.c.l.b16 %v475
        %v1012 = vunpack.c.h.b16 %v475
        %v1013 = vunpack.c.l.b16 %v476
        %v1014 = vunpack.c.h.b16 %v476
        %v1015 = vunpack.c.l.b16 %v477
        %v1016 = vunpack.c.h.b16 %v477
        %v1017 = vunpack.c.l.b16 %v478
        %v1018 = vunpack.c.h.b16 %v478
        %v1019 = vunpack.c.l.b16 %v479
        %v1020 = vunpack.c.h.b16 %v479
        %v1021 = vunpack.c.l.b16 %v480
        %v1022 = vunpack.c.h.b16 %v480
        %v1023 = vunpack.c.l.b16 %v481
        %v1024 = vunpack.c.h.b16 %v481
        %v1025 = vunpack.c.l.b16 %v482
        %v1026 = vunpack.c.h.b16 %v482
        %v1027 = vunpack.c.l.b16 %v483
        %v1028 = vunpack.c.h.b16 %v483
        %v1029 = vunpack.c.l.b16 %v484
        %v1030 = vunpack.c.h.b16 %v484
        %v1031 = vunpack.c.l.b16 %v485
        %v1032 = vunpack.c.h.b16 %v485
        %v1033 = vunpack.c.l.b16 %v486
        %v1034 = vunpack.c.h.b16 %v486
        %v1035 = vunpack.c.l.b16 %v487
        %v1036 = vunpack.c.h.b16 %v487
        %v1037 = vunpack.c.l.b16 %v488
        %v1038 = vunpack.c.h.b16 %v488
        %v1039 = vunpack.c.l.b16 %v489
        %v1040 = vunpack.c.h.b16 %v489
        %v1041 = vunpack.c.l.b16 %v490
        %v1042 = vunpack.c.h.b16 %v490
        %v1043 = vunpack.c.l.b16 %v491
        %v1044 = vunpack.c.h.b16 %v491
        %v1045 = vunpack.c.l.b16 %v492
        %v1046 = vunpack.c.h.b16 %v492
        %v1047 = vunpack.c.l.b16 %v493
        %v1048 = vunpack.c.h.b16 %v493
        %v1049 = vunpack.c.l.b16 %v494
        %v1050 = vunpack.c.h.b16 %v494
        %v1051 = vunpack.c.l.b16 %v495
        %v1052 = vunpack.c.h.b16 %v495
        %v1053 = vunpack.c.l.b16 %v496
        %v1054 = vunpack.c.h.b16 %v496
        %v1055 = vunpack.c.l.b16 %v497
        %v1056 = vunpack.c.h.b16 %v497
        %v1057 = vunpack.c.l.b16 %v498
        %v1058 = vunpack.c.h.b16 %v498
        %v1059 = vunpack.c.l.b16 %v499
        %v1060 = vunpack.c.h.b16 %v499
        %v1061 = vunpack.c.l.b16 %v500
        %v1062 = vunpack.c.h.b16 %v500
        %v1063 = vunpack.c.l.b16 %v501
        %v1064 = vunpack.c.h.b16 %v501
        %v1065 = vunpack.c.l.b16 %v502
        %v1066 = vunpack.c.h.b16 %v502
        %v1067 = vunpack.c.l.b16 %v503
        %v1068 = vunpack.c.h.b16 %v503
        %v1069 = vunpack.c.l.b16 %v504
        %v1070 = vunpack.c.h.b16 %v504
        %v1071 = vunpack.c.l.b16 %v505
        %v1072 = vunpack.c.h.b16 %v505
        %v1073 = vunpack.c.l.b16 %v506
        %v1074 = vunpack.c.h.b16 %v506
        %v1075 = vunpack.c.l.b16 %v507
        %v1076 = vunpack.c.h.b16 %v507
        %v1077 = vunpack.c.l.b16 %v508
        %v1078 = vunpack.c.h.b16 %v508
        %v1079 = vunpack.c.l.b16 %v509
        %v1080 = vunpack.c.h.b16 %v509
        %v1081 = vunpack.c.l.b16 %v510
        %v1082 = vunpack.c.h.b16 %v510
        %v1083 = vunpack.c.l.b16 %v511
        %v1084 = vunpack.c.h.b16 %v511
        %v1085 = vunpack.c.l.b16 %v512
        %v1086 = vunpack.c.h.b16 %v512
        %v1087 = vunpack.c.l.b16 %v513
        %v1088 = vunpack.c.h.b16 %v513
        %v1089 = vunpack.c.l.b16 %v514
        %v1090 = vunpack.c.h.b16 %v514
        %v1091 = vunpack.c.l.b16 %v515
        %v1092 = vunpack.c.h.b16 %v515
        %v1093 = vunpack.c.l.b16 %v516
        %v1094 = vunpack.c.h.b16 %v516
        %v1095 = vunpack.c.l.b16 %v517
        %v1096 = vunpack.c.h.b16 %v517
        %v1097 = vunpack.c.l.b16 %v518
        %v1098 = vunpack.c.h.b16 %v518
        %v1099 = vunpack.c.l.b16 %v519
        %v1100 = vunpack.c.h.b16 %v519
        %v1101 = vunpack.c.l.b16 %v520
        %v1102 = vunpack.c.h.b16 %v520
        %v1103 = vunpack.c.l.b16 %v521
        %v1104 = vunpack.c.h.b16 %v521
        %v1105 = vunpack.c.l.b16 %v522
        %v1106 = vunpack.c.h.b16 %v522
        %v1107 = vunpack.c.l.b16 %v523
        %v1108 = vunpack.c.h.b16 %v523
        %v1109 = vunpack.c.l.b16 %v524
        %v1110 = vunpack.c.h.b16 %v524
        %v1111 = vunpack.c.l.b16 %v525
        %v1112 = vunpack.c.h.b16 %v525
        %v1113 = vunpack.c.l.b16 %v526
        %v1114 = vunpack.c.h.b16 %v526
        %v1115 = vunpack.c.l.b16 %v527
        %v1116 = vunpack.c.h.b16 %v527
        %v1117 = vunpack.c.l.b16 %v528
        %v1118 = vunpack.c.h.b16 %v528
        %v1119 = vunpack.c.l.b16 %v529
        %v1120 = vunpack.c.h.b16 %v529
        %v1121 = vunpack.c.l.b16 %v530
        %v1122 = vunpack.c.h.b16 %v530
        %v1123 = vunpack.c.l.b16 %v531
        %v1124 = vunpack.c.h.b16 %v531
        %v1125 = vunpack.c.l.b16 %v532
        %v1126 = vunpack.c.h.b16 %v532
        %v1127 = vunpack.c.l.b16 %v533
        %v1128 = vunpack.c.h.b16 %v533
        %v1129 = vunpack.c.l.b16 %v534
        %v1130 = vunpack.c.h.b16 %v534
        %v1131 = vunpack.c.l.b16 %v535
        %v1132 = vunpack.c.h.b16 %v535
        %v1133 = vunpack.c.l.b16 %v536
        %v1134 = vunpack.c.h.b16 %v536
        %v1135 = vunpack.c.l.b16 %v537
        %v1136 = vunpack.c.h.b16 %v537
        %v1137 = vunpack.c.l.b16 %v538
        %v1138 = vunpack.c.h.b16 %v538
        %v1139 = vunpack.c.l.b16 %v539
        %v1140 = vunpack.c.h.b16 %v539
        %v1141 = vunpack.c.l.b16 %v540
        %v1142 = vunpack.c.h.b16 %v540
        %v1143 = vunpack.c.l.b16 %v541
        %v1144 = vunpack.c.h.b16 %v541
        %v1145 = vunpack.c.l.b16 %v542
        %v1146 = vunpack.c.h.b16 %v542
        %v1147 = vunpack.c.l.b16 %v543
        %v1148 = vunpack.c.h.b16 %v543
        %v1149 = vunpack.c.l.b16 %v544
        %v1150 = vunpack.c.h.b16 %v544
        %v1151 = vunpack.c.l.b16 %v545
        %v1152 = vunpack.c.h.b16 %v545
        %v1153 = vunpack.c.l.b16 %v546
        %v1154 = vunpack.c.h.b16 %v546
        %v1155 = vunpack.c.l.b16 %v547
        %v1156 = vunpack.c.h.b16 %v547
        %v1157 = vunpack.c.l.b16 %v548
        %v1158 = vunpack.c.h.b16 %v548
        %v1159 = vunpack.c.l.b16 %v549
        %v1160 = vunpack.c.h.b16 %v549
        %v1161 = vunpack.c.l.b16 %v550
        %v1162 = vunpack.c.h.b16 %v550
        %v1163 = vunpack.c.l.b16 %v551
        %v1164 = vunpack.c.h.b16 %v551
        %v1165 = vunpack.c.l.b16 %v552
        %v1166 = vunpack.c.h.b16 %v552
        %v1167 = vunpack.c.l.b16 %v553
        %v1168 = vunpack.c.h.b16 %v553
        %v1169 = vunpack.c.l.b16 %v554
        %v1170 = vunpack.c.h.b16 %v554
        %v1171 = vunpack.c.l.b16 %v555
        %v1172 = vunpack.c.h.b16 %v555
        %v1173 = vunpack.c.l.b16 %v556
        %v1174 = vunpack.c.h.b16 %v556
        %v1175 = vunpack.c.l.b16 %v557
        %v1176 = vunpack.c.h.b16 %v557
        %v1177 = vunpack.c.l.b16 %v558
        %v1178 = vunpack.c.h.b16 %v558
        %v1179 = vunpack.c.l.b16 %v559
        %v1180 = vunpack.c.h.b16 %v559
        %v1181 = vunpack.c.l.b16 %v560
        %v1182 = vunpack.c.h.b16 %v560
        %v1183 = vunpack.c.l.b16 %v561
        %v1184 = vunpack.c.h.b16 %v561
        %v1185 = vunpack.c.l.b16 %v562
        %v1186 = vunpack.c.h.b16 %v562
        %v1187 = vunpack.c.l.b16 %v563
        %v1188 = vunpack.c.h.b16 %v563
        %v1189 = vunpack.c.l.b16 %v564
        %v1190 = vunpack.c.h.b16 %v564
        %v1191 = vunpack.c.l.b16 %v565
        %v1192 = vunpack.c.h.b16 %v565
        %v1193 = vunpack.c.l.b16 %v566
        %v1194 = vunpack.c.h.b16 %v566
        %v1195 = vunpack.c.l.b16 %v567
        %v1196 = vunpack.c.h.b16 %v567
        %v1197 = vunpack.c.l.b16 %v568
        %v1198 = vunpack.c.h.b16 %v568
        %v1199 = vunpack.c.l.b16 %v569
        %v1200 = vunpack.c.h.b16 %v569
        %v1201 = vunpack.c.l.b16 %v570
        %v1202 = vunpack.c.h.b16 %v570
        %v1203 = vunpack.c.l.b16 %v571
        %v1204 = vunpack.c.h.b16 %v571
        %v1205 = vunpack.c.l.b16 %v572
        %v1206 = vunpack.c.h.b16 %v572
        %v1207 = vunpack.c.l.b16 %v573
        %v1208 = vunpack.c.h.b16 %v573
        %v1209 = vunpack.c.l.b16 %v574
        %v1210 = vunpack.c.h.b16 %v574
        %v1211 = vunpack.c.l.b16 %v575
        %v1212 = vunpack.c.h.b16 %v575
        %v1213 = vunpack.c.l.b16 %v576
        %v1214 = vunpack.c.h.b16 %v576
        %v1215 = vunpack.c.l.b16 %v577
        %v1216 = vunpack.c.h.b16 %v577
        %v1217 = vunpack.c.l.b16 %v578
        %v1218 = vunpack.c.h.b16 %v578
        %v1219 = vunpack.c.l.b16 %v579
        %v1220 = vunpack.c.h.b16 %v579
        %v1221 = vunpack.c.l.b16 %v580
        %v1222 = vunpack.c.h.b16 %v580
        %v1223 = vunpack.c.l.b16 %v581
        %v1224 = vunpack.c.h.b16 %v581
        %v1225 = vunpack.c.l.b16 %v582
        %v1226 = vunpack.c.h.b16 %v582
        %v1227 = vunpack.c.l.b16 %v583
        %v1228 = vunpack.c.h.b16 %v583
        %v1229 = vunpack.c.l.b16 %v584
        %v1230 = vunpack.c.h.b16 %v584
        %v1231 = vunpack.c.l.b16 %v585
        %v1232 = vunpack.c.h.b16 %v585
        %v1233 = vunpack.c.l.b16 %v586
        %v1234 = vunpack.c.h.b16 %v586
        %v1235 = vunpack.c.l.b16 %v587
        %v1236 = vunpack.c.h.b16 %v587
        %v1237 = vunpack.c.l.b16 %v588
        %v1238 = vunpack.c.h.b16 %v588
        %v1239 = vunpack.c.l.b16 %v589
        %v1240 = vunpack.c.h.b16 %v589
        %v1241 = vunpack.c.l.b16 %v590
        %v1242 = vunpack.c.h.b16 %v590
        %v1243 = vunpack.c.l.b16 %v591
        %v1244 = vunpack.c.h.b16 %v591
        %v1245 = vunpack.c.l.b16 %v592
        %v1246 = vunpack.c.h.b16 %v592
        %v1247 = vunpack.c.l.b16 %v593
        %v1248 = vunpack.c.h.b16 %v593
        %v1249 = vunpack.c.l.b16 %v594
        %v1250 = vunpack.c.h.b16 %v594
        %v1251 = vunpack.c.l.b16 %v595
        %v1252 = vunpack.c.h.b16 %v595
        %v1253 = vunpack.c.l.b16 %v596
        %v1254 = vunpack.c.h.b16 %v596
        %v1255 = vunpack.c.l.b16 %v597
        %v1256 = vunpack.c.h.b16 %v597
        %v1257 = vunpack.c.l.b16 %v598
        %v1258 = vunpack.c.h.b16 %v598
        %v1259 = vunpack.c.l.b16 %v599
        %v1260 = vunpack.c.h.b16 %v599
        %v1261 = vunpack.c.l.b16 %v600
        %v1262 = vunpack.c.h.b16 %v600
        %v1263 = vunpack.c.l.b16 %v601
        %v1264 = vunpack.c.h.b16 %v601
        %v1265 = vunpack.c.l.b16 %v602
        %v1266 = vunpack.c.h.b16 %v602
        %v1267 = vunpack.c.l.b16 %v603
        %v1268 = vunpack.c.h.b16 %v603
        %v1269 = vunpack.c.l.b16 %v604
        %v1270 = vunpack.c.h.b16 %v604
        %v1271 = vunpack.c.l.b16 %v605
        %v1272 = vunpack.c.h.b16 %v605
        %v1273 = vunpack.c.l.b16 %v606
        %v1274 = vunpack.c.h.b16 %v606
        %v1275 = vunpack.c.l.b16 %v607
        %v1276 = vunpack.c.h.b16 %v607
        %v1277 = vunpack.c.l.b16 %v608
        %v1278 = vunpack.c.h.b16 %v608
        %v1279 = vunpack.c.l.b16 %v609
        %v1280 = vunpack.c.h.b16 %v609
        %v1281 = vunpack.c.l.b16 %v610
        %v1282 = vunpack.c.h.b16 %v610
        %v1283 = vunpack.c.l.b16 %v611
        %v1284 = vunpack.c.h.b16 %v611
        %v1285 = vunpack.c.l.b16 %v612
        %v1286 = vunpack.c.h.b16 %v612
        %v1287 = vunpack.c.l.b16 %v613
        %v1288 = vunpack.c.h.b16 %v613
        %v1289 = vunpack.c.l.b16 %v614
        %v1290 = vunpack.c.h.b16 %v614
        %v1291 = vunpack.c.l.b16 %v615
        %v1292 = vunpack.c.h.b16 %v615
        %v1293 = vunpack.c.l.b16 %v616
        %v1294 = vunpack.c.h.b16 %v616
        %v1295 = vunpack.c.l.b16 %v617
        %v1296 = vunpack.c.h.b16 %v617
        %v1297 = vunpack.c.l.b16 %v618
        %v1298 = vunpack.c.h.b16 %v618
        %v1299 = vunpack.c.l.b16 %v619
        %v1300 = vunpack.c.h.b16 %v619
        %v1301 = vunpack.c.l.b16 %v620
        %v1302 = vunpack.c.h.b16 %v620
        %v1303 = vunpack.c.l.b16 %v621
        %v1304 = vunpack.c.h.b16 %v621
        %v1305 = vunpack.c.l.b16 %v622
        %v1306 = vunpack.c.h.b16 %v622
        %v1307 = vunpack.c.l.b16 %v623
        %v1308 = vunpack.c.h.b16 %v623
        %v1309 = vunpack.c.l.b16 %v624
        %v1310 = vunpack.c.h.b16 %v624
        %v1311 = vunpack.c.l.b16 %v625
        %v1312 = vunpack.c.h.b16 %v625
        %v1313 = vunpack.c.l.b16 %v626
        %v1314 = vunpack.c.h.b16 %v626
        %v1315 = vunpack.c.l.b16 %v627
        %v1316 = vunpack.c.h.b16 %v627
        %v1317 = vunpack.c.l.b16 %v628
        %v1318 = vunpack.c.h.b16 %v628
        %v1319 = vunpack.c.l.b16 %v629
        %v1320 = vunpack.c.h.b16 %v629
        %v1321 = vunpack.c.l.b16 %v630
        %v1322 = vunpack.c.h.b16 %v630
        %v1323 = vunpack.c.l.b16 %v631
        %v1324 = vunpack.c.h.b16 %v631
        %v1325 = vunpack.c.l.b16 %v632
        %v1326 = vunpack.c.h.b16 %v632
        %v1327 = vunpack.c.l.b16 %v633
        %v1328 = vunpack.c.h.b16 %v633
        %v1329 = vunpack.c.l.b16 %v634
        %v1330 = vunpack.c.h.b16 %v634
        %v1331 = vunpack.c.l.b16 %v635
        %v1332 = vunpack.c.h.b16 %v635
        %v1333 = vunpack.c.l.b16 %v636
        %v1334 = vunpack.c.h.b16 %v636
        %v1335 = vunpack.c.l.b16 %v637
        %v1336 = vunpack.c.h.b16 %v637
        %v1337 = vunpack.c.l.b16 %v638
        %v1338 = vunpack.c.h.b16 %v638
        %v1339 = vunpack.c.l.b16 %v639
        %v1340 = vunpack.c.h.b16 %v639
        %v1341 = vunpack.c.l.b16 %v640
        %v1342 = vunpack.c.h.b16 %v640
        %v1343 = vunpack.c.l.b16 %v641
        %v1344 = vunpack.c.h.b16 %v641
        %v1345 = vunpack.c.l.b16 %v642
        %v1346 = vunpack.c.h.b16 %v642
        %v1347 = vunpack.c.l.b16 %v643
        %v1348 = vunpack.c.h.b16 %v643
        %v1349 = vunpack.c.l.b16 %v644
        %v1350 = vunpack.c.h.b16 %v644
        %v1351 = vunpack.c.l.b16 %v645
        %v1352 = vunpack.c.h.b16 %v645
        %v1353 = vunpack.c.l.b16 %v646
        %v1354 = vunpack.c.h.b16 %v646
        %v1355 = vunpack.c.l.b16 %v647
        %v1356 = vunpack.c.h.b16 %v647
        %v1357 = vunpack.c.l.b16 %v648
        %v1358 = vunpack.c.h.b16 %v648
        %v1359 = vunpack.c.l.b16 %v649
        %v1360 = vunpack.c.h.b16 %v649
        %v1361 = vunpack.c.l.b16 %v650
        %v1362 = vunpack.c.h.b16 %v650
        %v1363 = vunpack.c.l.b16 %v651
        %v1364 = vunpack.c.h.b16 %v651
        %v1365 = vunpack.c.l.b16 %v652
        %v1366 = vunpack.c.h.b16 %v652
        %v1367 = vunpack.c.l.b16 %v653
        %v1368 = vunpack.c.h.b16 %v653
        %v1369 = vunpack.c.l.b16 %v654
        %v1370 = vunpack.c.h.b16 %v654
        %v1371 = vunpack.c.l.b16 %v655
        %v1372 = vunpack.c.h.b16 %v655
        %v1373 = vunpack.c.l.b16 %v656
        %v1374 = vunpack.c.h.b16 %v656
        %v1375 = vunpack.c.l.b16 %v657
        %v1376 = vunpack.c.h.b16 %v657
        %v1377 = vpack.c.b16 %v933, %v929
        %v1378 = vpack.c.b16 %v934, %v930
        %v1379 = vpack.c.b16 %v935, %v931
        %v1380 = vpack.c.b16 %v936, %v932
        %v1381 = vpack.c.b16 %v941, %v937
        %v1382 = vpack.c.b16 %v942, %v938
        %v1383 = vpack.c.b16 %v943, %v939
        %v1384 = vpack.c.b16 %v944, %v940
        %v1385 = vpack.c.b16 %v949, %v945
        %v1386 = vpack.c.b16 %v950, %v946
        %v1387 = vpack.c.b16 %v951, %v947
        %v1388 = vpack.c.b16 %v952, %v948
        %v1389 = vpack.c.b16 %v957, %v953
        %v1390 = vpack.c.b16 %v958, %v954
        %v1391 = vpack.c.b16 %v959, %v955
        %v1392 = vpack.c.b16 %v960, %v956
        %v1393 = vpack.c.b16 %v965, %v961
        %v1394 = vpack.c.b16 %v966, %v962
        %v1395 = vpack.c.b16 %v967, %v963
        %v1396 = vpack.c.b16 %v968, %v964
        %v1397 = vpack.c.b16 %v973, %v969
        %v1398 = vpack.c.b16 %v974, %v970
        %v1399 = vpack.c.b16 %v975, %v971
        %v1400 = vpack.c.b16 %v976, %v972
        %v1401 = vpack.c.b16 %v981, %v977
        %v1402 = vpack.c.b16 %v982, %v978
        %v1403 = vpack.c.b16 %v983, %v979
        %v1404 = vpack.c.b16 %v984, %v980
        %v1405 = vpack.c.b16 %v989, %v985
        %v1406 = vpack.c.b16 %v990, %v986
        %v1407 = vpack.c.b16 %v991, %v987
        %v1408 = vpack.c.b16 %v992, %v988
        %v1409 = vpack.c.b16 %v997, %v993
        %v1410 = vpack.c.b16 %v998, %v994
        %v1411 = vpack.c.b16 %v999, %v995
        %v1412 = vpack.c.b16 %v1000, %v996
        %v1413 = vpack.c.b16 %v1005, %v1001
        %v1414 = vpack.c.b16 %v1006, %v1002
        %v1415 = vpack.c.b16 %v1007, %v1003
        %v1416 = vpack.c.b16 %v1008, %v1004
        %v1417 = vpack.c.b16 %v1013, %v1009
        %v1418 = vpack.c.b16 %v1014, %v1010
        %v1419 = vpack.c.b16 %v1015, %v1011
        %v1420 = vpack.c.b16 %v1016, %v1012
        %v1421 = vpack.c.b16 %v1021, %v1017
        %v1422 = vpack.c.b16 %v1022, %v1018
        %v1423 = vpack.c.b16 %v1023, %v1019
        %v1424 = vpack.c.b16 %v1024, %v1020
        %v1425 = vpack.c.b16 %v1029, %v1025
        %v1426 = vpack.c.b16 %v1030, %v1026
        %v1427 = vpack.c.b16 %v1031, %v1027
        %v1428 = vpack.c.b16 %v1032, %v1028
        %v1429 = vpack.c.b16 %v1037, %v1033
        %v1430 = vpack.c.b16 %v1038, %v1034
        %v1431 = vpack.c.b16 %v1039, %v1035
        %v1432 = vpack.c.b16 %v1040, %v1036
        %v1433 = vpack.c.b16 %v1045, %v1041
        %v1434 = vpack.c.b16 %v1046, %v1042
        %v1435 = vpack.c.b16 %v1047, %v1043
        %v1436 = vpack.c.b16 %v1048, %v1044
        %v1437 = vpack.c.b16 %v1053, %v1049
        %v1438 = vpack.c.b16 %v1054, %v1050
        %v1439 = vpack.c.b16 %v1055, %v1051
        %v1440 = vpack.c.b16 %v1056, %v1052
        %v1441 = vpack.c.b16 %v1061, %v1057
        %v1442 = vpack.c.b16 %v1062, %v1058
        %v1443 = vpack.c.b16 %v1063, %v1059
        %v1444 = vpack.c.b16 %v1064, %v1060
        %v1445 = vpack.c.b16 %v1069, %v1065
        %v1446 = vpack.c.b16 %v1070, %v1066
        %v1447 = vpack.c.b16 %v1071, %v1067
        %v1448 = vpack.c.b16 %v1072, %v1068
        %v1449 = vpack.c.b16 %v1077, %v1073
        %v1450 = vpack.c.b16 %v1078, %v1074
        %v1451 = vpack.c.b16 %v1079, %v1075
        %v1452 = vpack.c.b16 %v1080, %v1076
        %v1453 = vpack.c.b16 %v1085, %v1081
        %v1454 = vpack.c.b16 %v1086, %v1082
        %v1455 = vpack.c.b16 %v1087, %v1083
        %v1456 = vpack.c.b16 %v1088, %v1084
        %v1457 = vpack.c.b16 %v1093, %v1089
        %v1458 = vpack.c.b16 %v1094, %v1090
        %v1459 = vpack.c.b16 %v1095, %v1091
        %v1460 = vpack.c.b16 %v1096, %v1092
        %v1461 = vpack.c.b16 %v1101, %v1097
        %v1462 = vpack.c.b16 %v1102, %v1098
        %v1463 = vpack.c.b16 %v1103, %v1099
        %v1464 = vpack.c.b16 %v1104, %v1100
        %v1465 = vpack.c.b16 %v1109, %v1105
        %v1466 = vpack.c.b16 %v1110, %v1106
        %v1467 = vpack.c.b16 %v1111, %v1107
        %v1468 = vpack.c.b16 %v1112, %v1108
        %v1469 = vpack.c.b16 %v1117, %v1113
        %v1470 = vpack.c.b16 %v1118, %v1114
        %v1471 = vpack.c.b16 %v1119, %v1115
        %v1472 = vpack.c.b16 %v1120, %v1116
        %v1473 = vpack.c.b16 %v1125, %v1121
        %v1474 = vpack.c.b16 %v1126, %v1122
        %v1475 = vpack.c.b16 %v1127, %v1123
        %v1476 = vpack.c.b16 %v1128, %v1124
        %v1477 = vpack.c.b16 %v1133, %v1129
        %v1478 = vpack.c.b16 %v1134, %v1130
        %v1479 = vpack.c.b16 %v1135, %v1131
        %v1480 = vpack.c.b16 %v1136, %v1132
        %v1481 = vpack.c.b16 %v1141, %v1137
        %v1482 = vpack.c.b16 %v1142, %v1138
        %v1483 = vpack.c.b16 %v1143, %v1139
        %v1484 = vpack.c.b16 %v1144, %v1140
        %v1485 = vpack.c.b16 %v1149, %v1145
        %v1486 = vpack.c.b16 %v1150, %v1146
        %v1487 = vpack.c.b16 %v1151, %v1147
        %v1488 = vpack.c.b16 %v1152, %v1148
        %v1489 = vpack.c.b16 %v1157, %v1153
        %v1490 = vpack.c.b16 %v1158, %v1154
        %v1491 = vpack.c.b16 %v1159, %v1155
        %v1492 = vpack.c.b16 %v1160, %v1156
        %v1493 = vpack.c.b16 %v1165, %v1161
        %v1494 = vpack.c.b16 %v1166, %v1162
        %v1495 = vpack.c.b16 %v1167, %v1163
        %v1496 = vpack.c.b16 %v1168, %v1164
        %v1497 = vpack.c.b16 %v1173, %v1169
        %v1498 = vpack.c.b16 %v1174, %v1170
        %v1499 = vpack.c.b16 %v1175, %v1171
        %v1500 = vpack.c.b16 %v1176, %v1172
        %v1501 = vpack.c.b16 %v1181, %v1177
        %v1502 = vpack.c.b16 %v1182, %v1178
        %v1503 = vpack.c.b16 %v1183, %v1179
        %v1504 = vpack.c.b16 %v1184, %v1180
        %v1505 = vpack.c.b16 %v1189, %v1185
        %v1506 = vpack.c.b16 %v1190, %v1186
        %v1507 = vpack.c.b16 %v1191, %v1187
        %v1508 = vpack.c.b16 %v1192, %v1188
        %v1509 = vpack.c.b16 %v1197, %v1193
        %v1510 = vpack.c.b16 %v1198, %v1194
        %v1511 = vpack.c.b16 %v1199, %v1195
        %v1512 = vpack.c.b16 %v1200, %v1196
        %v1513 = vpack.c.b16 %v1205, %v1201
        %v1514 = vpack.c.b16 %v1206, %v1202
        %v1515 = vpack.c.b16 %v1207, %v1203
        %v1516 = vpack.c.b16 %v1208, %v1204
        %v1517 = vpack.c.b16 %v1213, %v1209
        %v1518 = vpack.c.b16 %v1214, %v1210
        %v1519 = vpack.c.b16 %v1215, %v1211
        %v1520 = vpack.c.b16 %v1216, %v1212
        %v1521 = vpack.c.b16 %v1221, %v1217
        %v1522 = vpack.c.b16 %v1222, %v1218
        %v1523 = vpack.c.b16 %v1223, %v1219
        %v1524 = vpack.c.b16 %v1224, %v1220
        %v1525 = vpack.c.b16 %v1229, %v1225
        %v1526 = vpack.c.b16 %v1230, %v1226
        %v1527 = vpack.c.b16 %v1231, %v1227
        %v1528 = vpack.c.b16 %v1232, %v1228
        %v1529 = vpack.c.b16 %v1237, %v1233
        %v1530 = vpack.c.b16 %v1238, %v1234
        %v1531 = vpack.c.b16 %v1239, %v1235
        %v1532 = vpack.c.b16 %v1240, %v1236
        %v1533 = vpack.c.b16 %v1245, %v1241
        %v1534 = vpack.c.b16 %v1246, %v1242
        %v1535 = vpack.c.b16 %v1247, %v1243
        %v1536 = vpack.c.b16 %v1248, %v1244
        %v1537 = vpack.c.b16 %v1253, %v1249
        %v1538 = vpack.c.b16 %v1254, %v1250
        %v1539 = vpack.c.b16 %v1255, %v1251
        %v1540 = vpack.c.b16 %v1256, %v1252
        %v1541 = vpack.c.b16 %v1261, %v1257
        %v1542 = vpack.c.b16 %v1262, %v1258
        %v1543 = vpack.c.b16 %v1263, %v1259
        %v1544 = vpack.c.b16 %v1264, %v1260
        %v1545 = vpack.c.b16 %v1269, %v1265
        %v1546 = vpack.c.b16 %v1270, %v1266
        %v1547 = vpack.c.b16 %v1271, %v1267
        %v1548 = vpack.c.b16 %v1272, %v1268
        %v1549 = vpack.c.b16 %v1277, %v1273
        %v1550 = vpack.c.b16 %v1278, %v1274
        %v1551 = vpack.c.b16 %v1279, %v1275
        %v1552 = vpack.c.b16 %v1280, %v1276
        %v1553 = vpack.c.b16 %v1285, %v1281
        %v1554 = vpack.c.b16 %v1286, %v1282
        %v1555 = vpack.c.b16 %v1287, %v1283
        %v1556 = vpack.c.b16 %v1288, %v1284
        %v1557 = vpack.c.b16 %v1293, %v1289
        %v1558 = vpack.c.b16 %v1294, %v1290
        %v1559 = vpack.c.b16 %v1295, %v1291
        %v1560 = vpack.c.b16 %v1296, %v1292
        %v1561 = vpack.c.b16 %v1301, %v1297
        %v1562 = vpack.c.b16 %v1302, %v1298
        %v1563 = vpack.c.b16 %v1303, %v1299
        %v1564 = vpack.c.b16 %v1304, %v1300
        %v1565 = vpack.c.b16 %v1309, %v1305
        %v1566 = vpack.c.b16 %v1310, %v1306
        %v1567 = vpack.c.b16 %v1311, %v1307
        %v1568 = vpack.c.b16 %v1312, %v1308
        %v1569 = vpack.c.b16 %v1317, %v1313
        %v1570 = vpack.c.b16 %v1318, %v1314
        %v1571 = vpack.c.b16 %v1319, %v1315
        %v1572 = vpack.c.b16 %v1320, %v1316
        %v1573 = vpack.c.b16 %v1325, %v1321
        %v1574 = vpack.c.b16 %v1326, %v1322
        %v1575 = vpack.c.b16 %v1327, %v1323
        %v1576 = vpack.c.b16 %v1328, %v1324
        %v1577 = vpack.c.b16 %v1333, %v1329
        %v1578 = vpack.c.b16 %v1334, %v1330
        %v1579 = vpack.c.b16 %v1335, %v1331
        %v1580 = vpack.c.b16 %v1336, %v1332
        %v1581 = vpack.c.b16 %v1341, %v1337
        %v1582 = vpack.c.b16 %v1342, %v1338
        %v1583 = vpack.c.b16 %v1343, %v1339
        %v1584 = vpack.c.b16 %v1344, %v1340
        %v1585 = vpack.c.b16 %v1349, %v1345
        %v1586 = vpack.c.b16 %v1350, %v1346
        %v1587 = vpack.c.b16 %v1351, %v1347
        %v1588 = vpack.c.b16 %v1352, %v1348
        %v1589 = vpack.c.b16 %v1357, %v1353
        %v1590 = vpack.c.b16 %v1358, %v1354
        %v1591 = vpack.c.b16 %v1359, %v1355
        %v1592 = vpack.c.b16 %v1360, %v1356
        %v1593 = vpack.c.b16 %v1365, %v1361
        %v1594 = vpack.c.b16 %v1366, %v1362
        %v1595 = vpack.c.b16 %v1367, %v1363
        %v1596 = vpack.c.b16 %v1368, %v1364
        %v1597 = vpack.c.b16 %v1373, %v1369
        %v1598 = vpack.c.b16 %v1374, %v1370
        %v1599 = vpack.c.b16 %v1375, %v1371
        %v1600 = vpack.c.b16 %v1376, %v1372
        %1825 = vmatprep.subr.bf16.mxu0 %v1406
        %1826 = vmatpush1.bf16.msra.mxu0 %v1405
        %1827 = vmatprep.subr.bf16.mxu0 %v1402
        %1828 = vmatpush1.bf16.msra.mxu0 %v1401
        %1829 = vmatprep.subr.bf16.mxu0 %v1398
        %1830 = vmatpush1.bf16.msra.mxu0 %v1397
        %1831 = vmatprep.subr.bf16.mxu0 %v1394
        %1832 = vmatpush1.bf16.msra.mxu0 %v1393
        %1833 = vmatprep.subr.bf16.mxu0 %v1390
        %1834 = vmatpush1.bf16.msra.mxu0 %v1389
        %1835 = vmatprep.subr.bf16.mxu0 %v1386
        %1836 = vmatpush1.bf16.msra.mxu0 %v1385
        %1837 = vmatprep.subr.bf16.mxu0 %v1382
        %1838 = vmatpush1.bf16.msra.mxu0 %v1381
        %1839 = vmatprep.subr.bf16.mxu0 %v1378
        %1840 = vmatpush1.bf16.msra.mxu0 %v1377
        %1841 = vmatprep.subr.bf16.mxu0 %v1438
        %1842 = vmatpush2.bf16.msra.mxu0 %v1437
        %1843 = vmatprep.subr.bf16.mxu0 %v1434
        %1844 = vmatpush2.bf16.msra.mxu0 %v1433
        %1845 = vmatprep.subr.bf16.mxu0 %v1430
        %1846 = vmatpush2.bf16.msra.mxu0 %v1429
        %1847 = vmatprep.subr.bf16.mxu0 %v1426
        %1848 = vmatpush2.bf16.msra.mxu0 %v1425
        %1849 = vmatprep.subr.bf16.mxu0 %v1422
        %1850 = vmatpush2.bf16.msra.mxu0 %v1421
        %1851 = vmatprep.subr.bf16.mxu0 %v1418
        %1852 = vmatpush2.bf16.msra.mxu0 %v1417
        %1853 = vmatprep.subr.bf16.mxu0 %v1414
        %1854 = vmatpush2.bf16.msra.mxu0 %v1413
        %1855 = vmatprep.subr.bf16.mxu0 %v1410
        %1856 = vmatpush2.bf16.msra.mxu0 %v1409
        %1857 = vmatprep.mubr.bf16.mxu0 %v692
        %1858 = vmatmul.mubr.bf16.gmra.mxu0 %v691
        %v1859 = vpop.f32.mrf.mxu0
        %v1860 = vadd.f32 %v663, %v1859
        %v1861 = vpop.f32.mrf.mxu0
        %v1862 = vadd.f32 %v667, %v1861
        %v1863 = vpop.f32.mrf.mxu0
        %v1864 = vpop.f32.mrf.mxu0
        %1865 = vdwg.mxu0
        %1866 = vmatprep.subr.bf16.mxu0 %v1470
        %1867 = vmatpush1.bf16.msra.mxu0 %v1469
        %1868 = vmatprep.subr.bf16.mxu0 %v1466
        %1869 = vmatpush1.bf16.msra.mxu0 %v1465
        %1870 = vmatprep.subr.bf16.mxu0 %v1462
        %1871 = vmatpush1.bf16.msra.mxu0 %v1461
        %1872 = vmatprep.subr.bf16.mxu0 %v1458
        %1873 = vmatpush1.bf16.msra.mxu0 %v1457
        %1874 = vmatprep.subr.bf16.mxu0 %v1454
        %1875 = vmatpush1.bf16.msra.mxu0 %v1453
        %1876 = vmatprep.subr.bf16.mxu0 %v1450
        %1877 = vmatpush1.bf16.msra.mxu0 %v1449
        %1878 = vmatprep.subr.bf16.mxu0 %v1446
        %1879 = vmatpush1.bf16.msra.mxu0 %v1445
        %1880 = vmatprep.subr.bf16.mxu0 %v1442
        %1881 = vmatpush1.bf16.msra.mxu0 %v1441
        %1882 = vmatprep.subr.bf16.mxu0 %v1502
        %1883 = vmatpush2.bf16.msra.mxu0 %v1501
        %1884 = vmatprep.subr.bf16.mxu0 %v1498
        %1885 = vmatpush2.bf16.msra.mxu0 %v1497
        %1886 = vmatprep.subr.bf16.mxu0 %v1494
        %1887 = vmatpush2.bf16.msra.mxu0 %v1493
        %1888 = vmatprep.subr.bf16.mxu0 %v1490
        %1889 = vmatpush2.bf16.msra.mxu0 %v1489
        %1890 = vmatprep.subr.bf16.mxu0 %v1486
        %1891 = vmatpush2.bf16.msra.mxu0 %v1485
        %1892 = vmatprep.subr.bf16.mxu0 %v1482
        %1893 = vmatpush2.bf16.msra.mxu0 %v1481
        %1894 = vmatprep.subr.bf16.mxu0 %v1478
        %1895 = vmatpush2.bf16.msra.mxu0 %v1477
        %1896 = vmatprep.subr.bf16.mxu0 %v1474
        %1897 = vmatpush2.bf16.msra.mxu0 %v1473
        %1898 = vmatprep.mubr.bf16.mxu0 %v694
        %1899 = vmatmul.mubr.bf16.gmra.mxu0 %v693
        %v1900 = vpop.f32.mrf.mxu0
        %v1901 = vadd.f32 %v1860, %v1900
        %v1902 = vpop.f32.mrf.mxu0
        %v1903 = vadd.f32 %v1862, %v1902
        %v1904 = vpop.f32.mrf.mxu0
        %v1905 = vpop.f32.mrf.mxu0
        %1906 = vdwg.mxu0
        %1907 = vmatprep.subr.bf16.mxu0 %v1534
        %1908 = vmatpush1.bf16.msra.mxu0 %v1533
        %1909 = vmatprep.subr.bf16.mxu0 %v1530
        %1910 = vmatpush1.bf16.msra.mxu0 %v1529
        %1911 = vmatprep.subr.bf16.mxu0 %v1526
        %1912 = vmatpush1.bf16.msra.mxu0 %v1525
        %1913 = vmatprep.subr.bf16.mxu0 %v1522
        %1914 = vmatpush1.bf16.msra.mxu0 %v1521
        %1915 = vmatprep.subr.bf16.mxu0 %v1518
        %1916 = vmatpush1.bf16.msra.mxu0 %v1517
        %1917 = vmatprep.subr.bf16.mxu0 %v1514
        %1918 = vmatpush1.bf16.msra.mxu0 %v1513
        %1919 = vmatprep.subr.bf16.mxu0 %v1510
        %1920 = vmatpush1.bf16.msra.mxu0 %v1509
        %1921 = vmatprep.subr.bf16.mxu0 %v1506
        %1922 = vmatpush1.bf16.msra.mxu0 %v1505
        %1923 = vmatprep.subr.bf16.mxu0 %v1566
        %1924 = vmatpush2.bf16.msra.mxu0 %v1565
        %1925 = vmatprep.subr.bf16.mxu0 %v1562
        %1926 = vmatpush2.bf16.msra.mxu0 %v1561
        %1927 = vmatprep.subr.bf16.mxu0 %v1558
        %1928 = vmatpush2.bf16.msra.mxu0 %v1557
        %1929 = vmatprep.subr.bf16.mxu0 %v1554
        %1930 = vmatpush2.bf16.msra.mxu0 %v1553
        %1931 = vmatprep.subr.bf16.mxu0 %v1550
        %1932 = vmatpush2.bf16.msra.mxu0 %v1549
        %1933 = vmatprep.subr.bf16.mxu0 %v1546
        %1934 = vmatpush2.bf16.msra.mxu0 %v1545
        %1935 = vmatprep.subr.bf16.mxu0 %v1542
        %1936 = vmatpush2.bf16.msra.mxu0 %v1541
        %1937 = vmatprep.subr.bf16.mxu0 %v1538
        %1938 = vmatpush2.bf16.msra.mxu0 %v1537
        %1939 = vmatprep.mubr.bf16.mxu0 %v696
        %1940 = vmatmul.mubr.bf16.gmra.mxu0 %v695
        %v1941 = vpop.f32.mrf.mxu0
        %v1942 = vadd.f32 %v1901, %v1941
        %v1943 = vpop.f32.mrf.mxu0
        %v1944 = vadd.f32 %v1903, %v1943
        %v1945 = vpop.f32.mrf.mxu0
        %v1946 = vpop.f32.mrf.mxu0
        %1947 = vdwg.mxu0
        %1948 = vmatprep.subr.bf16.mxu0 %v1598
        %1949 = vmatpush1.bf16.msra.mxu0 %v1597
        %1950 = vmatprep.subr.bf16.mxu0 %v1594
        %1951 = vmatpush1.bf16.msra.mxu0 %v1593
        %1952 = vmatprep.subr.bf16.mxu0 %v1590
        %1953 = vmatpush1.bf16.msra.mxu0 %v1589
        %1954 = vmatprep.subr.bf16.mxu0 %v1586
        %1955 = vmatpush1.bf16.msra.mxu0 %v1585
        %1956 = vmatprep.subr.bf16.mxu0 %v1582
        %1957 = vmatpush1.bf16.msra.mxu0 %v1581
        %1958 = vmatprep.subr.bf16.mxu0 %v1578
        %1959 = vmatpush1.bf16.msra.mxu0 %v1577
        %1960 = vmatprep.subr.bf16.mxu0 %v1574
        %1961 = vmatpush1.bf16.msra.mxu0 %v1573
        %1962 = vmatprep.subr.bf16.mxu0 %v1570
        %1963 = vmatpush1.bf16.msra.mxu0 %v1569
        %1964 = vmatprep.subr.bf16.mxu0 0
        %1965 = vmatpush2.bf16.msra.mxu0 0
        %1966 = vmatprep.subr.bf16.mxu0 0
        %1967 = vmatpush2.bf16.msra.mxu0 0
        %1968 = vmatprep.subr.bf16.mxu0 0
        %1969 = vmatpush2.bf16.msra.mxu0 0
        %1970 = vmatprep.subr.bf16.mxu0 0
        %1971 = vmatpush2.bf16.msra.mxu0 0
        %1972 = vmatprep.subr.bf16.mxu0 0
        %1973 = vmatpush2.bf16.msra.mxu0 0
        %1974 = vmatprep.subr.bf16.mxu0 0
        %1975 = vmatpush2.bf16.msra.mxu0 0
        %1976 = vmatprep.subr.bf16.mxu0 0
        %1977 = vmatpush2.bf16.msra.mxu0 0
        %1978 = vmatprep.subr.bf16.mxu0 0
        %1979 = vmatpush2.bf16.msra.mxu0 0
        %1980 = vmatprep.mubr.bf16.mxu0 0
        %1981 = vmatmul.mubr.bf16.gmra.mxu0 %v697
        %v1982 = vpop.f32.mrf.mxu0
        %v1983 = vadd.f32 %v1942, %v1982
        %v1984 = vpop.f32.mrf.mxu0
        %v1985 = vadd.f32 %v1944, %v1984
        %v1986 = vpop.f32.mrf.mxu0
        %v1987 = vpop.f32.mrf.mxu0
        %1988 = vdwg.mxu0
        %1989 = vmatprep.subr.bf16.mxu0 %v1408
        %1990 = vmatpush1.bf16.msra.mxu0 %v1407
        %1991 = vmatprep.subr.bf16.mxu0 %v1404
        %1992 = vmatpush1.bf16.msra.mxu0 %v1403
        %1993 = vmatprep.subr.bf16.mxu0 %v1400
        %1994 = vmatpush1.bf16.msra.mxu0 %v1399
        %1995 = vmatprep.subr.bf16.mxu0 %v1396
        %1996 = vmatpush1.bf16.msra.mxu0 %v1395
        %1997 = vmatprep.subr.bf16.mxu0 %v1392
        %1998 = vmatpush1.bf16.msra.mxu0 %v1391
        %1999 = vmatprep.subr.bf16.mxu0 %v1388
        %2000 = vmatpush1.bf16.msra.mxu0 %v1387
        %2001 = vmatprep.subr.bf16.mxu0 %v1384
        %2002 = vmatpush1.bf16.msra.mxu0 %v1383
        %2003 = vmatprep.subr.bf16.mxu0 %v1380
        %2004 = vmatpush1.bf16.msra.mxu0 %v1379
        %2005 = vmatprep.subr.bf16.mxu0 %v1440
        %2006 = vmatpush2.bf16.msra.mxu0 %v1439
        %2007 = vmatprep.subr.bf16.mxu0 %v1436
        %2008 = vmatpush2.bf16.msra.mxu0 %v1435
        %2009 = vmatprep.subr.bf16.mxu0 %v1432
        %2010 = vmatpush2.bf16.msra.mxu0 %v1431
        %2011 = vmatprep.subr.bf16.mxu0 %v1428
        %2012 = vmatpush2.bf16.msra.mxu0 %v1427
        %2013 = vmatprep.subr.bf16.mxu0 %v1424
        %2014 = vmatpush2.bf16.msra.mxu0 %v1423
        %2015 = vmatprep.subr.bf16.mxu0 %v1420
        %2016 = vmatpush2.bf16.msra.mxu0 %v1419
        %2017 = vmatprep.subr.bf16.mxu0 %v1416
        %2018 = vmatpush2.bf16.msra.mxu0 %v1415
        %2019 = vmatprep.subr.bf16.mxu0 %v1412
        %2020 = vmatpush2.bf16.msra.mxu0 %v1411
        %2021 = vmatprep.mubr.bf16.mxu0 %v692
        %2022 = vmatmul.mubr.bf16.gmra.mxu0 %v691
        %v2023 = vpop.f32.mrf.mxu0
        %v2024 = vadd.f32 %v671, %v2023
        %v2025 = vpop.f32.mrf.mxu0
        %v2026 = vadd.f32 %v675, %v2025
        %v2027 = vpop.f32.mrf.mxu0
        %v2028 = vpop.f32.mrf.mxu0
        %2029 = vdwg.mxu0
        %2030 = vmatprep.subr.bf16.mxu0 %v1472
        %2031 = vmatpush1.bf16.msra.mxu0 %v1471
        %2032 = vmatprep.subr.bf16.mxu0 %v1468
        %2033 = vmatpush1.bf16.msra.mxu0 %v1467
        %2034 = vmatprep.subr.bf16.mxu0 %v1464
        %2035 = vmatpush1.bf16.msra.mxu0 %v1463
        %2036 = vmatprep.subr.bf16.mxu0 %v1460
        %2037 = vmatpush1.bf16.msra.mxu0 %v1459
        %2038 = vmatprep.subr.bf16.mxu0 %v1456
        %2039 = vmatpush1.bf16.msra.mxu0 %v1455
        %2040 = vmatprep.subr.bf16.mxu0 %v1452
        %2041 = vmatpush1.bf16.msra.mxu0 %v1451
        %2042 = vmatprep.subr.bf16.mxu0 %v1448
        %2043 = vmatpush1.bf16.msra.mxu0 %v1447
        %2044 = vmatprep.subr.bf16.mxu0 %v1444
        %2045 = vmatpush1.bf16.msra.mxu0 %v1443
        %2046 = vmatprep.subr.bf16.mxu0 %v1504
        %2047 = vmatpush2.bf16.msra.mxu0 %v1503
        %2048 = vmatprep.subr.bf16.mxu0 %v1500
        %2049 = vmatpush2.bf16.msra.mxu0 %v1499
        %2050 = vmatprep.subr.bf16.mxu0 %v1496
        %2051 = vmatpush2.bf16.msra.mxu0 %v1495
        %2052 = vmatprep.subr.bf16.mxu0 %v1492
        %2053 = vmatpush2.bf16.msra.mxu0 %v1491
        %2054 = vmatprep.subr.bf16.mxu0 %v1488
        %2055 = vmatpush2.bf16.msra.mxu0 %v1487
        %2056 = vmatprep.subr.bf16.mxu0 %v1484
        %2057 = vmatpush2.bf16.msra.mxu0 %v1483
        %2058 = vmatprep.subr.bf16.mxu0 %v1480
        %2059 = vmatpush2.bf16.msra.mxu0 %v1479
        %2060 = vmatprep.subr.bf16.mxu0 %v1476
        %2061 = vmatpush2.bf16.msra.mxu0 %v1475
        %2062 = vmatprep.mubr.bf16.mxu0 %v694
        %2063 = vmatmul.mubr.bf16.gmra.mxu0 %v693
        %v2064 = vpop.f32.mrf.mxu0
        %v2065 = vadd.f32 %v2024, %v2064
        %v2066 = vpop.f32.mrf.mxu0
        %v2067 = vadd.f32 %v2026, %v2066
        %v2068 = vpop.f32.mrf.mxu0
        %v2069 = vpop.f32.mrf.mxu0
        %2070 = vdwg.mxu0
        %2071 = vmatprep.subr.bf16.mxu0 %v1536
        %2072 = vmatpush1.bf16.msra.mxu0 %v1535
        %2073 = vmatprep.subr.bf16.mxu0 %v1532
        %2074 = vmatpush1.bf16.msra.mxu0 %v1531
        %2075 = vmatprep.subr.bf16.mxu0 %v1528
        %2076 = vmatpush1.bf16.msra.mxu0 %v1527
        %2077 = vmatprep.subr.bf16.mxu0 %v1524
        %2078 = vmatpush1.bf16.msra.mxu0 %v1523
        %2079 = vmatprep.subr.bf16.mxu0 %v1520
        %2080 = vmatpush1.bf16.msra.mxu0 %v1519
        %2081 = vmatprep.subr.bf16.mxu0 %v1516
        %2082 = vmatpush1.bf16.msra.mxu0 %v1515
        %2083 = vmatprep.subr.bf16.mxu0 %v1512
        %2084 = vmatpush1.bf16.msra.mxu0 %v1511
        %2085 = vmatprep.subr.bf16.mxu0 %v1508
        %2086 = vmatpush1.bf16.msra.mxu0 %v1507
        %2087 = vmatprep.subr.bf16.mxu0 %v1568
        %2088 = vmatpush2.bf16.msra.mxu0 %v1567
        %2089 = vmatprep.subr.bf16.mxu0 %v1564
        %2090 = vmatpush2.bf16.msra.mxu0 %v1563
        %2091 = vmatprep.subr.bf16.mxu0 %v1560
        %2092 = vmatpush2.bf16.msra.mxu0 %v1559
        %2093 = vmatprep.subr.bf16.mxu0 %v1556
        %2094 = vmatpush2.bf16.msra.mxu0 %v1555
        %2095 = vmatprep.subr.bf16.mxu0 %v1552
        %2096 = vmatpush2.bf16.msra.mxu0 %v1551
        %2097 = vmatprep.subr.bf16.mxu0 %v1548
        %2098 = vmatpush2.bf16.msra.mxu0 %v1547
        %2099 = vmatprep.subr.bf16.mxu0 %v1544
        %2100 = vmatpush2.bf16.msra.mxu0 %v1543
        %2101 = vmatprep.subr.bf16.mxu0 %v1540
        %2102 = vmatpush2.bf16.msra.mxu0 %v1539
        %2103 = vmatprep.mubr.bf16.mxu0 %v696
        %2104 = vmatmul.mubr.bf16.gmra.mxu0 %v695
        %v2105 = vpop.f32.mrf.mxu0
        %v2106 = vadd.f32 %v2065, %v2105
        %v2107 = vpop.f32.mrf.mxu0
        %v2108 = vadd.f32 %v2067, %v2107
        %v2109 = vpop.f32.mrf.mxu0
        %v2110 = vpop.f32.mrf.mxu0
        %2111 = vdwg.mxu0
        %2112 = vmatprep.subr.bf16.mxu0 %v1600
        %2113 = vmatpush1.bf16.msra.mxu0 %v1599
        %2114 = vmatprep.subr.bf16.mxu0 %v1596
        %2115 = vmatpush1.bf16.msra.mxu0 %v1595
        %2116 = vmatprep.subr.bf16.mxu0 %v1592
        %2117 = vmatpush1.bf16.msra.mxu0 %v1591
        %2118 = vmatprep.subr.bf16.mxu0 %v1588
        %2119 = vmatpush1.bf16.msra.mxu0 %v1587
        %2120 = vmatprep.subr.bf16.mxu0 %v1584
        %2121 = vmatpush1.bf16.msra.mxu0 %v1583
        %2122 = vmatprep.subr.bf16.mxu0 %v1580
        %2123 = vmatpush1.bf16.msra.mxu0 %v1579
        %2124 = vmatprep.subr.bf16.mxu0 %v1576
        %2125 = vmatpush1.bf16.msra.mxu0 %v1575
        %2126 = vmatprep.subr.bf16.mxu0 %v1572
        %2127 = vmatpush1.bf16.msra.mxu0 %v1571
        %2128 = vmatprep.subr.bf16.mxu0 0
        %2129 = vmatpush2.bf16.msra.mxu0 0
        %2130 = vmatprep.subr.bf16.mxu0 0
        %2131 = vmatpush2.bf16.msra.mxu0 0
        %2132 = vmatprep.subr.bf16.mxu0 0
        %2133 = vmatpush2.bf16.msra.mxu0 0
        %2134 = vmatprep.subr.bf16.mxu0 0
        %2135 = vmatpush2.bf16.msra.mxu0 0
        %2136 = vmatprep.subr.bf16.mxu0 0
        %2137 = vmatpush2.bf16.msra.mxu0 0
        %2138 = vmatprep.subr.bf16.mxu0 0
        %2139 = vmatpush2.bf16.msra.mxu0 0
        %2140 = vmatprep.subr.bf16.mxu0 0
        %2141 = vmatpush2.bf16.msra.mxu0 0
        %2142 = vmatprep.subr.bf16.mxu0 0
        %2143 = vmatpush2.bf16.msra.mxu0 0
        %2144 = vmatprep.mubr.bf16.mxu0 0
        %2145 = vmatmul.mubr.bf16.gmra.mxu0 %v697
        %v2146 = vpop.f32.mrf.mxu0
        %v2147 = vadd.f32 %v2106, %v2146
        %v2148 = vpop.f32.mrf.mxu0
        %v2149 = vadd.f32 %v2108, %v2148
        %v2150 = vpop.f32.mrf.mxu0
        %v2151 = vpop.f32.mrf.mxu0
        %2152 = vdwg.mxu0
        %v2153 = vmax.f32 %v1983, 0.0
        %v2154 = vmax.f32 %v1985, 0.0
        %v2155 = vmax.f32 %v2147, 0.0
        %v2156 = vmax.f32 %v2149, 0.0
        %v2157 = vpack.c.bf16 %v2153, %v2153
        %v2158 = vpack.c.bf16 %v2154, %v2154
        %v2159 = vpack.c.bf16 %v2155, %v2155
        %v2160 = vpack.c.bf16 %v2156, %v2156
        %v2161 = vld [vmem:[#allocation5] sm:$0xff]
        %v2162 = vld [vmem:[#allocation5 + $0x8] sm:$0xff]
        %v2163 = vld [vmem:[#allocation5 + $0x10] sm:$0xff]
        %v2164 = vld [vmem:[#allocation5 + $0x18] sm:$0xff]
        %v2165 = vld [vmem:[#allocation5 + $0x20] sm:$0xff]
        %v2166 = vld [vmem:[#allocation5 + $0x28] sm:$0xff]
        %v2167 = vld [vmem:[#allocation5 + $0x30] sm:$0xff]
        %v2168 = vld [vmem:[#allocation5 + $0x38] sm:$0xff]
        %v2169 = vld [vmem:[#allocation5 + $0x40] sm:$0xff]
        %v2170 = vld [vmem:[#allocation5 + $0x48] sm:$0xff]
        %v2171 = vld [vmem:[#allocation5 + $0x50] sm:$0xff]
        %v2172 = vld [vmem:[#allocation5 + $0x58] sm:$0xff]
        %v2173 = vld [vmem:[#allocation5 + $0x60] sm:$0xff]
        %v2174 = vld [vmem:[#allocation5 + $0x68] sm:$0xff]
        %v2175 = vld [vmem:[#allocation5 + $0x70] sm:$0xff]
        %v2176 = vld [vmem:[#allocation5 + $0x78] sm:$0xff]
        %v2177 = vld [vmem:[#allocation5 + $0x80] sm:$0xff]
        %v2178 = vld [vmem:[#allocation5 + $0x88] sm:$0xff]
        %v2179 = vld [vmem:[#allocation5 + $0x90] sm:$0xff]
        %v2180 = vld [vmem:[#allocation5 + $0x98] sm:$0xff]
        %v2181 = vld [vmem:[#allocation5 + $0xa0] sm:$0xff]
        %v2182 = vld [vmem:[#allocation5 + $0xa8] sm:$0xff]
        %v2183 = vld [vmem:[#allocation5 + $0xb0] sm:$0xff]
        %v2184 = vld [vmem:[#allocation5 + $0xb8] sm:$0xff]
        %v2185 = vld [vmem:[#allocation5 + $0xc0] sm:$0xff]
        %v2186 = vld [vmem:[#allocation5 + $0xc8] sm:$0xff]
        %v2187 = vld [vmem:[#allocation5 + $0xd0] sm:$0xff]
        %v2188 = vld [vmem:[#allocation5 + $0xd8] sm:$0xff]
        %v2189 = vld [vmem:[#allocation5 + $0xe0] sm:$0xff]
        %v2190 = vld [vmem:[#allocation5 + $0xe8] sm:$0xff]
        %v2191 = vld [vmem:[#allocation5 + $0xf0] sm:$0xff]
        %v2192 = vld [vmem:[#allocation5 + $0xf8] sm:$0xff]
        %v2193 = vld [vmem:[#allocation5 + $0x100] sm:$0xff]
        %v2194 = vld [vmem:[#allocation5 + $0x108] sm:$0xff]
        %v2195 = vld [vmem:[#allocation5 + $0x110] sm:$0xff]
        %v2196 = vld [vmem:[#allocation5 + $0x118] sm:$0xff]
        %v2197 = vld [vmem:[#allocation5 + $0x120] sm:$0xff]
        %v2198 = vld [vmem:[#allocation5 + $0x128] sm:$0xff]
        %v2199 = vld [vmem:[#allocation5 + $0x130] sm:$0xff]
        %v2200 = vld [vmem:[#allocation5 + $0x138] sm:$0xff]
        %v2201 = vld [vmem:[#allocation5 + $0x140] sm:$0xff]
        %v2202 = vld [vmem:[#allocation5 + $0x148] sm:$0xff]
        %v2203 = vld [vmem:[#allocation5 + $0x150] sm:$0xff]
        %v2204 = vld [vmem:[#allocation5 + $0x158] sm:$0xff]
        %v2205 = vld [vmem:[#allocation5 + $0x160] sm:$0xff]
        %v2206 = vld [vmem:[#allocation5 + $0x168] sm:$0xff]
        %v2207 = vld [vmem:[#allocation5 + $0x170] sm:$0xff]
        %v2208 = vld [vmem:[#allocation5 + $0x178] sm:$0xff]
        %v2209 = vld [vmem:[#allocation5 + $0x180] sm:$0xff]
        %v2210 = vld [vmem:[#allocation5 + $0x188] sm:$0xff]
        %v2211 = vld [vmem:[#allocation5 + $0x190] sm:$0xff]
        %v2212 = vld [vmem:[#allocation5 + $0x198] sm:$0xff]
        %v2213 = vld [vmem:[#allocation5 + $0x1a0] sm:$0xff]
        %v2214 = vld [vmem:[#allocation5 + $0x1a8] sm:$0xff]
        %v2215 = vld [vmem:[#allocation5 + $0x1b0] sm:$0xff]
        %v2216 = vld [vmem:[#allocation5 + $0x1b8] sm:$0xff]
        %v2217 = vld [vmem:[#allocation5 + $0x1c0] sm:$0xff]
        %v2218 = vld [vmem:[#allocation5 + $0x1c8] sm:$0xff]
        %v2219 = vld [vmem:[#allocation5 + $0x1d0] sm:$0xff]
        %v2220 = vld [vmem:[#allocation5 + $0x1d8] sm:$0xff]
        %v2221 = vld [vmem:[#allocation5 + $0x1e0] sm:$0xff]
        %v2222 = vld [vmem:[#allocation5 + $0x1e8] sm:$0xff]
        %v2223 = vld [vmem:[#allocation5 + $0x1f0] sm:$0xff]
        %v2224 = vld [vmem:[#allocation5 + $0x1f8] sm:$0xff]
        %v2225 = vld [vmem:[%s4] sm:$0x3]
        %v2227 = vlaneseq
        %v2228 = vshrl.u32 %v2227, 7
        %v2229 = vsub.s32 0, %v2228
        %v2230 = vrot.slane %v2225, %v2229
        %v2231 = vlaneseq
        %v2232 = vshrl.u32 %v2231, 7
        %v2233 = vsub.s32 1, %v2232
        %v2234 = vrot.slane %v2225, %v2233
        %v2301 = vunpack.c.l.b16 %v2161
        %v2302 = vunpack.c.h.b16 %v2161
        %v2303 = vunpack.c.l.b16 %v2162
        %v2304 = vunpack.c.h.b16 %v2162
        %v2305 = vunpack.c.l.b16 %v2163
        %v2306 = vunpack.c.h.b16 %v2163
        %v2307 = vunpack.c.l.b16 %v2164
        %v2308 = vunpack.c.h.b16 %v2164
        %v2309 = vunpack.c.l.b16 %v2165
        %v2310 = vunpack.c.h.b16 %v2165
        %v2311 = vunpack.c.l.b16 %v2166
        %v2312 = vunpack.c.h.b16 %v2166
        %v2313 = vunpack.c.l.b16 %v2167
        %v2314 = vunpack.c.h.b16 %v2167
        %v2315 = vunpack.c.l.b16 %v2168
        %v2316 = vunpack.c.h.b16 %v2168
        %v2317 = vunpack.c.l.b16 %v2169
        %v2318 = vunpack.c.h.b16 %v2169
        %v2319 = vunpack.c.l.b16 %v2170
        %v2320 = vunpack.c.h.b16 %v2170
        %v2321 = vunpack.c.l.b16 %v2171
        %v2322 = vunpack.c.h.b16 %v2171
        %v2323 = vunpack.c.l.b16 %v2172
        %v2324 = vunpack.c.h.b16 %v2172
        %v2325 = vunpack.c.l.b16 %v2173
        %v2326 = vunpack.c.h.b16 %v2173
        %v2327 = vunpack.c.l.b16 %v2174
        %v2328 = vunpack.c.h.b16 %v2174
        %v2329 = vunpack.c.l.b16 %v2175
        %v2330 = vunpack.c.h.b16 %v2175
        %v2331 = vunpack.c.l.b16 %v2176
        %v2332 = vunpack.c.h.b16 %v2176
        %v2333 = vunpack.c.l.b16 %v2177
        %v2334 = vunpack.c.h.b16 %v2177
        %v2335 = vunpack.c.l.b16 %v2178
        %v2336 = vunpack.c.h.b16 %v2178
        %v2337 = vunpack.c.l.b16 %v2179
        %v2338 = vunpack.c.h.b16 %v2179
        %v2339 = vunpack.c.l.b16 %v2180
        %v2340 = vunpack.c.h.b16 %v2180
        %v2341 = vunpack.c.l.b16 %v2181
        %v2342 = vunpack.c.h.b16 %v2181
        %v2343 = vunpack.c.l.b16 %v2182
        %v2344 = vunpack.c.h.b16 %v2182
        %v2345 = vunpack.c.l.b16 %v2183
        %v2346 = vunpack.c.h.b16 %v2183
        %v2347 = vunpack.c.l.b16 %v2184
        %v2348 = vunpack.c.h.b16 %v2184
        %v2349 = vunpack.c.l.b16 %v2185
        %v2350 = vunpack.c.h.b16 %v2185
        %v2351 = vunpack.c.l.b16 %v2186
        %v2352 = vunpack.c.h.b16 %v2186
        %v2353 = vunpack.c.l.b16 %v2187
        %v2354 = vunpack.c.h.b16 %v2187
        %v2355 = vunpack.c.l.b16 %v2188
        %v2356 = vunpack.c.h.b16 %v2188
        %v2357 = vunpack.c.l.b16 %v2189
        %v2358 = vunpack.c.h.b16 %v2189
        %v2359 = vunpack.c.l.b16 %v2190
        %v2360 = vunpack.c.h.b16 %v2190
        %v2361 = vunpack.c.l.b16 %v2191
        %v2362 = vunpack.c.h.b16 %v2191
        %v2363 = vunpack.c.l.b16 %v2192
        %v2364 = vunpack.c.h.b16 %v2192
        %v2365 = vunpack.c.l.b16 %v2193
        %v2366 = vunpack.c.h.b16 %v2193
        %v2367 = vunpack.c.l.b16 %v2194
        %v2368 = vunpack.c.h.b16 %v2194
        %v2369 = vunpack.c.l.b16 %v2195
        %v2370 = vunpack.c.h.b16 %v2195
        %v2371 = vunpack.c.l.b16 %v2196
        %v2372 = vunpack.c.h.b16 %v2196
        %v2373 = vunpack.c.l.b16 %v2197
        %v2374 = vunpack.c.h.b16 %v2197
        %v2375 = vunpack.c.l.b16 %v2198
        %v2376 = vunpack.c.h.b16 %v2198
        %v2377 = vunpack.c.l.b16 %v2199
        %v2378 = vunpack.c.h.b16 %v2199
        %v2379 = vunpack.c.l.b16 %v2200
        %v2380 = vunpack.c.h.b16 %v2200
        %v2381 = vunpack.c.l.b16 %v2201
        %v2382 = vunpack.c.h.b16 %v2201
        %v2383 = vunpack.c.l.b16 %v2202
        %v2384 = vunpack.c.h.b16 %v2202
        %v2385 = vunpack.c.l.b16 %v2203
        %v2386 = vunpack.c.h.b16 %v2203
        %v2387 = vunpack.c.l.b16 %v2204
        %v2388 = vunpack.c.h.b16 %v2204
        %v2389 = vunpack.c.l.b16 %v2205
        %v2390 = vunpack.c.h.b16 %v2205
        %v2391 = vunpack.c.l.b16 %v2206
        %v2392 = vunpack.c.h.b16 %v2206
        %v2393 = vunpack.c.l.b16 %v2207
        %v2394 = vunpack.c.h.b16 %v2207
        %v2395 = vunpack.c.l.b16 %v2208
        %v2396 = vunpack.c.h.b16 %v2208
        %v2397 = vunpack.c.l.b16 %v2209
        %v2398 = vunpack.c.h.b16 %v2209
        %v2399 = vunpack.c.l.b16 %v2210
        %v2400 = vunpack.c.h.b16 %v2210
        %v2401 = vunpack.c.l.b16 %v2211
        %v2402 = vunpack.c.h.b16 %v2211
        %v2403 = vunpack.c.l.b16 %v2212
        %v2404 = vunpack.c.h.b16 %v2212
        %v2405 = vunpack.c.l.b16 %v2213
        %v2406 = vunpack.c.h.b16 %v2213
        %v2407 = vunpack.c.l.b16 %v2214
        %v2408 = vunpack.c.h.b16 %v2214
        %v2409 = vunpack.c.l.b16 %v2215
        %v2410 = vunpack.c.h.b16 %v2215
        %v2411 = vunpack.c.l.b16 %v2216
        %v2412 = vunpack.c.h.b16 %v2216
        %v2413 = vunpack.c.l.b16 %v2217
        %v2414 = vunpack.c.h.b16 %v2217
        %v2415 = vunpack.c.l.b16 %v2218
        %v2416 = vunpack.c.h.b16 %v2218
        %v2417 = vunpack.c.l.b16 %v2219
        %v2418 = vunpack.c.h.b16 %v2219
        %v2419 = vunpack.c.l.b16 %v2220
        %v2420 = vunpack.c.h.b16 %v2220
        %v2421 = vunpack.c.l.b16 %v2221
        %v2422 = vunpack.c.h.b16 %v2221
        %v2423 = vunpack.c.l.b16 %v2222
        %v2424 = vunpack.c.h.b16 %v2222
        %v2425 = vunpack.c.l.b16 %v2223
        %v2426 = vunpack.c.h.b16 %v2223
        %v2427 = vunpack.c.l.b16 %v2224
        %v2428 = vunpack.c.h.b16 %v2224
        %v2429 = vpack.c.b16 %v2303, %v2301
        %v2430 = vpack.c.b16 %v2304, %v2302
        %v2431 = vpack.c.b16 %v2307, %v2305
        %v2432 = vpack.c.b16 %v2308, %v2306
        %v2433 = vpack.c.b16 %v2311, %v2309
        %v2434 = vpack.c.b16 %v2312, %v2310
        %v2435 = vpack.c.b16 %v2315, %v2313
        %v2436 = vpack.c.b16 %v2316, %v2314
        %v2437 = vpack.c.b16 %v2319, %v2317
        %v2438 = vpack.c.b16 %v2320, %v2318
        %v2439 = vpack.c.b16 %v2323, %v2321
        %v2440 = vpack.c.b16 %v2324, %v2322
        %v2441 = vpack.c.b16 %v2327, %v2325
        %v2442 = vpack.c.b16 %v2328, %v2326
        %v2443 = vpack.c.b16 %v2331, %v2329
        %v2444 = vpack.c.b16 %v2332, %v2330
        %v2445 = vpack.c.b16 %v2335, %v2333
        %v2446 = vpack.c.b16 %v2336, %v2334
        %v2447 = vpack.c.b16 %v2339, %v2337
        %v2448 = vpack.c.b16 %v2340, %v2338
        %v2449 = vpack.c.b16 %v2343, %v2341
        %v2450 = vpack.c.b16 %v2344, %v2342
        %v2451 = vpack.c.b16 %v2347, %v2345
        %v2452 = vpack.c.b16 %v2348, %v2346
        %v2453 = vpack.c.b16 %v2351, %v2349
        %v2454 = vpack.c.b16 %v2352, %v2350
        %v2455 = vpack.c.b16 %v2355, %v2353
        %v2456 = vpack.c.b16 %v2356, %v2354
        %v2457 = vpack.c.b16 %v2359, %v2357
        %v2458 = vpack.c.b16 %v2360, %v2358
        %v2459 = vpack.c.b16 %v2363, %v2361
        %v2460 = vpack.c.b16 %v2364, %v2362
        %v2461 = vpack.c.b16 %v2367, %v2365
        %v2462 = vpack.c.b16 %v2368, %v2366
        %v2463 = vpack.c.b16 %v2371, %v2369
        %v2464 = vpack.c.b16 %v2372, %v2370
        %v2465 = vpack.c.b16 %v2375, %v2373
        %v2466 = vpack.c.b16 %v2376, %v2374
        %v2467 = vpack.c.b16 %v2379, %v2377
        %v2468 = vpack.c.b16 %v2380, %v2378
        %v2469 = vpack.c.b16 %v2383, %v2381
        %v2470 = vpack.c.b16 %v2384, %v2382
        %v2471 = vpack.c.b16 %v2387, %v2385
        %v2472 = vpack.c.b16 %v2388, %v2386
        %v2473 = vpack.c.b16 %v2391, %v2389
        %v2474 = vpack.c.b16 %v2392, %v2390
        %v2475 = vpack.c.b16 %v2395, %v2393
        %v2476 = vpack.c.b16 %v2396, %v2394
        %v2477 = vpack.c.b16 %v2399, %v2397
        %v2478 = vpack.c.b16 %v2400, %v2398
        %v2479 = vpack.c.b16 %v2403, %v2401
        %v2480 = vpack.c.b16 %v2404, %v2402
        %v2481 = vpack.c.b16 %v2407, %v2405
        %v2482 = vpack.c.b16 %v2408, %v2406
        %v2483 = vpack.c.b16 %v2411, %v2409
        %v2484 = vpack.c.b16 %v2412, %v2410
        %v2485 = vpack.c.b16 %v2415, %v2413
        %v2486 = vpack.c.b16 %v2416, %v2414
        %v2487 = vpack.c.b16 %v2419, %v2417
        %v2488 = vpack.c.b16 %v2420, %v2418
        %v2489 = vpack.c.b16 %v2423, %v2421
        %v2490 = vpack.c.b16 %v2424, %v2422
        %v2491 = vpack.c.b16 %v2427, %v2425
        %v2492 = vpack.c.b16 %v2428, %v2426
        %2557 = vmatprep.subr.bf16.mxu0 %v2444
        %2558 = vmatpush1.bf16.msra.mxu0 %v2443
        %2559 = vmatprep.subr.bf16.mxu0 %v2442
        %2560 = vmatpush1.bf16.msra.mxu0 %v2441
        %2561 = vmatprep.subr.bf16.mxu0 %v2440
        %2562 = vmatpush1.bf16.msra.mxu0 %v2439
        %2563 = vmatprep.subr.bf16.mxu0 %v2438
        %2564 = vmatpush1.bf16.msra.mxu0 %v2437
        %2565 = vmatprep.subr.bf16.mxu0 %v2436
        %2566 = vmatpush1.bf16.msra.mxu0 %v2435
        %2567 = vmatprep.subr.bf16.mxu0 %v2434
        %2568 = vmatpush1.bf16.msra.mxu0 %v2433
        %2569 = vmatprep.subr.bf16.mxu0 %v2432
        %2570 = vmatpush1.bf16.msra.mxu0 %v2431
        %2571 = vmatprep.subr.bf16.mxu0 %v2430
        %2572 = vmatpush1.bf16.msra.mxu0 %v2429
        %2573 = vmatprep.subr.bf16.mxu0 %v2460
        %2574 = vmatpush2.bf16.msra.mxu0 %v2459
        %2575 = vmatprep.subr.bf16.mxu0 %v2458
        %2576 = vmatpush2.bf16.msra.mxu0 %v2457
        %2577 = vmatprep.subr.bf16.mxu0 %v2456
        %2578 = vmatpush2.bf16.msra.mxu0 %v2455
        %2579 = vmatprep.subr.bf16.mxu0 %v2454
        %2580 = vmatpush2.bf16.msra.mxu0 %v2453
        %2581 = vmatprep.subr.bf16.mxu0 %v2452
        %2582 = vmatpush2.bf16.msra.mxu0 %v2451
        %2583 = vmatprep.subr.bf16.mxu0 %v2450
        %2584 = vmatpush2.bf16.msra.mxu0 %v2449
        %2585 = vmatprep.subr.bf16.mxu0 %v2448
        %2586 = vmatpush2.bf16.msra.mxu0 %v2447
        %2587 = vmatprep.subr.bf16.mxu0 %v2446
        %2588 = vmatpush2.bf16.msra.mxu0 %v2445
        %2589 = vmatprep.mubr.bf16.mxu0 %v2158
        %2590 = vmatmul.mubr.bf16.gmra.mxu0 %v2157
        %v2591 = vpop.f32.mrf.mxu0
        %v2592 = vadd.f32 %v2230, %v2591
        %v2593 = vpop.f32.mrf.mxu0
        %v2594 = vadd.f32 %v2234, %v2593
        %v2595 = vpop.f32.mrf.mxu0
        %v2596 = vpop.f32.mrf.mxu0
        %2597 = vdwg.mxu0
        %2598 = vmatprep.subr.bf16.mxu0 %v2476
        %2599 = vmatpush1.bf16.msra.mxu0 %v2475
        %2600 = vmatprep.subr.bf16.mxu0 %v2474
        %2601 = vmatpush1.bf16.msra.mxu0 %v2473
        %2602 = vmatprep.subr.bf16.mxu0 %v2472
        %2603 = vmatpush1.bf16.msra.mxu0 %v2471
        %2604 = vmatprep.subr.bf16.mxu0 %v2470
        %2605 = vmatpush1.bf16.msra.mxu0 %v2469
        %2606 = vmatprep.subr.bf16.mxu0 %v2468
        %2607 = vmatpush1.bf16.msra.mxu0 %v2467
        %2608 = vmatprep.subr.bf16.mxu0 %v2466
        %2609 = vmatpush1.bf16.msra.mxu0 %v2465
        %2610 = vmatprep.subr.bf16.mxu0 %v2464
        %2611 = vmatpush1.bf16.msra.mxu0 %v2463
        %2612 = vmatprep.subr.bf16.mxu0 %v2462
        %2613 = vmatpush1.bf16.msra.mxu0 %v2461
        %2614 = vmatprep.subr.bf16.mxu0 %v2492
        %2615 = vmatpush2.bf16.msra.mxu0 %v2491
        %2616 = vmatprep.subr.bf16.mxu0 %v2490
        %2617 = vmatpush2.bf16.msra.mxu0 %v2489
        %2618 = vmatprep.subr.bf16.mxu0 %v2488
        %2619 = vmatpush2.bf16.msra.mxu0 %v2487
        %2620 = vmatprep.subr.bf16.mxu0 %v2486
        %2621 = vmatpush2.bf16.msra.mxu0 %v2485
        %2622 = vmatprep.subr.bf16.mxu0 %v2484
        %2623 = vmatpush2.bf16.msra.mxu0 %v2483
        %2624 = vmatprep.subr.bf16.mxu0 %v2482
        %2625 = vmatpush2.bf16.msra.mxu0 %v2481
        %2626 = vmatprep.subr.bf16.mxu0 %v2480
        %2627 = vmatpush2.bf16.msra.mxu0 %v2479
        %2628 = vmatprep.subr.bf16.mxu0 %v2478
        %2629 = vmatpush2.bf16.msra.mxu0 %v2477
        %2630 = vmatprep.mubr.bf16.mxu0 %v2160
        %2631 = vmatmul.mubr.bf16.gmra.mxu0 %v2159
        %v2632 = vpop.f32.mrf.mxu0
        %v2633 = vadd.f32 %v2592, %v2632
        %v2634 = vpop.f32.mrf.mxu0
        %v2635 = vadd.f32 %v2594, %v2634
        %v2636 = vpop.f32.mrf.mxu0
        %v2637 = vpop.f32.mrf.mxu0
        %2638 = vdwg.mxu0
        %v2639 = vmax.f32 %v2633, 0.0
        %v2640 = vmax.f32 %v2635, 0.0
        %v2641 = vpack.c.bf16 %v2639, %v2639
        %v2642 = vpack.c.bf16 %v2640, %v2640
        %v2643 = vld [vmem:[#allocation7] sm:$0xf]
        %v2644 = vld [vmem:[#allocation7 + $0x4] sm:$0xf]
        %v2645 = vld [vmem:[#allocation7 + $0x8] sm:$0xf]
        %v2646 = vld [vmem:[#allocation7 + $0xc] sm:$0xf]
        %v2647 = vld [vmem:[#allocation7 + $0x10] sm:$0xf]
        %v2648 = vld [vmem:[#allocation7 + $0x14] sm:$0xf]
        %v2649 = vld [vmem:[#allocation7 + $0x18] sm:$0xf]
        %v2650 = vld [vmem:[#allocation7 + $0x1c] sm:$0xf]
        %v2651 = vld [vmem:[#allocation7 + $0x20] sm:$0xf]
        %v2652 = vld [vmem:[#allocation7 + $0x24] sm:$0xf]
        %v2653 = vld [vmem:[#allocation7 + $0x28] sm:$0xf]
        %v2654 = vld [vmem:[#allocation7 + $0x2c] sm:$0xf]
        %v2655 = vld [vmem:[#allocation7 + $0x30] sm:$0xf]
        %v2656 = vld [vmem:[#allocation7 + $0x34] sm:$0xf]
        %v2657 = vld [vmem:[#allocation7 + $0x38] sm:$0xf]
        %v2658 = vld [vmem:[#allocation7 + $0x3c] sm:$0xf]
        %v2659 = vld [vmem:[#allocation7 + $0x40] sm:$0xf]
        %v2660 = vld [vmem:[#allocation7 + $0x44] sm:$0xf]
        %v2661 = vld [vmem:[#allocation7 + $0x48] sm:$0xf]
        %v2662 = vld [vmem:[#allocation7 + $0x4c] sm:$0xf]
        %v2663 = vld [vmem:[#allocation7 + $0x50] sm:$0xf]
        %v2664 = vld [vmem:[#allocation7 + $0x54] sm:$0xf]
        %v2665 = vld [vmem:[#allocation7 + $0x58] sm:$0xf]
        %v2666 = vld [vmem:[#allocation7 + $0x5c] sm:$0xf]
        %v2667 = vld [vmem:[#allocation7 + $0x60] sm:$0xf]
        %v2668 = vld [vmem:[#allocation7 + $0x64] sm:$0xf]
        %v2669 = vld [vmem:[#allocation7 + $0x68] sm:$0xf]
        %v2670 = vld [vmem:[#allocation7 + $0x6c] sm:$0xf]
        %v2671 = vld [vmem:[#allocation7 + $0x70] sm:$0xf]
        %v2672 = vld [vmem:[#allocation7 + $0x74] sm:$0xf]
        %v2673 = vld [vmem:[#allocation7 + $0x78] sm:$0xf]
        %v2674 = vld [vmem:[#allocation7 + $0x7c] sm:$0xf]
        %v2675 = vld [vmem:[%s6] sm:$0x1]
        %v2677 = vlaneseq
        %v2678 = vshrl.u32 %v2677, 7
        %v2679 = vsub.s32 0, %v2678
        %v2680 = vrot.slane %v2675, %v2679
        %v2714 = vunpack.c.l.b16 %v2643
        %v2715 = vunpack.c.l.b16 %v2644
        %v2716 = vunpack.c.l.b16 %v2645
        %v2717 = vunpack.c.l.b16 %v2646
        %v2718 = vunpack.c.l.b16 %v2647
        %v2719 = vunpack.c.l.b16 %v2648
        %v2720 = vunpack.c.l.b16 %v2649
        %v2721 = vunpack.c.l.b16 %v2650
        %v2722 = vunpack.c.l.b16 %v2651
        %v2723 = vunpack.c.l.b16 %v2652
        %v2724 = vunpack.c.l.b16 %v2653
        %v2725 = vunpack.c.l.b16 %v2654
        %v2726 = vunpack.c.l.b16 %v2655
        %v2727 = vunpack.c.l.b16 %v2656
        %v2728 = vunpack.c.l.b16 %v2657
        %v2729 = vunpack.c.l.b16 %v2658
        %v2730 = vunpack.c.l.b16 %v2659
        %v2731 = vunpack.c.l.b16 %v2660
        %v2732 = vunpack.c.l.b16 %v2661
        %v2733 = vunpack.c.l.b16 %v2662
        %v2734 = vunpack.c.l.b16 %v2663
        %v2735 = vunpack.c.l.b16 %v2664
        %v2736 = vunpack.c.l.b16 %v2665
        %v2737 = vunpack.c.l.b16 %v2666
        %v2738 = vunpack.c.l.b16 %v2667
        %v2739 = vunpack.c.l.b16 %v2668
        %v2740 = vunpack.c.l.b16 %v2669
        %v2741 = vunpack.c.l.b16 %v2670
        %v2742 = vunpack.c.l.b16 %v2671
        %v2743 = vunpack.c.l.b16 %v2672
        %v2744 = vunpack.c.l.b16 %v2673
        %v2745 = vunpack.c.l.b16 %v2674
        %v2746 = vpack.c.b16 %v2715, %v2714
        %v2747 = vpack.c.b16 %v2717, %v2716
        %v2748 = vpack.c.b16 %v2719, %v2718
        %v2749 = vpack.c.b16 %v2721, %v2720
        %v2750 = vpack.c.b16 %v2723, %v2722
        %v2751 = vpack.c.b16 %v2725, %v2724
        %v2752 = vpack.c.b16 %v2727, %v2726
        %v2753 = vpack.c.b16 %v2729, %v2728
        %v2754 = vpack.c.b16 %v2731, %v2730
        %v2755 = vpack.c.b16 %v2733, %v2732
        %v2756 = vpack.c.b16 %v2735, %v2734
        %v2757 = vpack.c.b16 %v2737, %v2736
        %v2758 = vpack.c.b16 %v2739, %v2738
        %v2759 = vpack.c.b16 %v2741, %v2740
        %v2760 = vpack.c.b16 %v2743, %v2742
        %v2761 = vpack.c.b16 %v2745, %v2744
        %2778 = vmatprep.subr.bf16.mxu0 0
        %2779 = vmatpush1.bf16.msra.mxu0 %v2753
        %2780 = vmatprep.subr.bf16.mxu0 0
        %2781 = vmatpush1.bf16.msra.mxu0 %v2752
        %2782 = vmatprep.subr.bf16.mxu0 0
        %2783 = vmatpush1.bf16.msra.mxu0 %v2751
        %2784 = vmatprep.subr.bf16.mxu0 0
        %2785 = vmatpush1.bf16.msra.mxu0 %v2750
        %2786 = vmatprep.subr.bf16.mxu0 0
        %2787 = vmatpush1.bf16.msra.mxu0 %v2749
        %2788 = vmatprep.subr.bf16.mxu0 0
        %2789 = vmatpush1.bf16.msra.mxu0 %v2748
        %2790 = vmatprep.subr.bf16.mxu0 0
        %2791 = vmatpush1.bf16.msra.mxu0 %v2747
        %2792 = vmatprep.subr.bf16.mxu0 0
        %2793 = vmatpush1.bf16.msra.mxu0 %v2746
        %2794 = vmatprep.subr.bf16.mxu0 0
        %2795 = vmatpush2.bf16.msra.mxu0 %v2761
        %2796 = vmatprep.subr.bf16.mxu0 0
        %2797 = vmatpush2.bf16.msra.mxu0 %v2760
        %2798 = vmatprep.subr.bf16.mxu0 0
        %2799 = vmatpush2.bf16.msra.mxu0 %v2759
        %2800 = vmatprep.subr.bf16.mxu0 0
        %2801 = vmatpush2.bf16.msra.mxu0 %v2758
        %2802 = vmatprep.subr.bf16.mxu0 0
        %2803 = vmatpush2.bf16.msra.mxu0 %v2757
        %2804 = vmatprep.subr.bf16.mxu0 0
        %2805 = vmatpush2.bf16.msra.mxu0 %v2756
        %2806 = vmatprep.subr.bf16.mxu0 0
        %2807 = vmatpush2.bf16.msra.mxu0 %v2755
        %2808 = vmatprep.subr.bf16.mxu0 0
        %2809 = vmatpush2.bf16.msra.mxu0 %v2754
        %2810 = vmatprep.mubr.bf16.mxu0 %v2642
        %2811 = vmatmul.mubr.bf16.gmra.mxu0 %v2641
        %v2812 = vpop.f32.mrf.mxu0
        %v2813 = vadd.f32 %v2680, %v2812
        %v2814 = vpop.f32.mrf.mxu0
        %v2815 = vpop.f32.mrf.mxu0
        %v2816 = vpop.f32.mrf.mxu0
        %2817 = vdwg.mxu0
        %v2818 = vmax.f32 %v2813, 0.0
        %v2819 = vpack.c.bf16 %v2818, %v2818
        %v2820 = vld [vmem:[%s7] sm:$0xf]
        %v2821 = vld [vmem:[%s7 + $0x4] sm:$0xf]
        %v2822 = vld [vmem:[%s7 + $0x8] sm:$0xf]
        %v2823 = vld [vmem:[%s7 + $0xc] sm:$0xf]
        %v2824 = vld [vmem:[%s7 + $0x10] sm:$0xf]
        %v2825 = vld [vmem:[%s7 + $0x14] sm:$0xf]
        %v2826 = vld [vmem:[%s7 + $0x18] sm:$0xf]
        %v2827 = vld [vmem:[%s7 + $0x1c] sm:$0xf]
        %v2828 = vld [vmem:[%s7 + $0x20] sm:$0xf]
        %v2829 = vld [vmem:[%s7 + $0x24] sm:$0xf]
        %v2830 = vld [vmem:[%s7 + $0x28] sm:$0xf]
        %v2831 = vld [vmem:[%s7 + $0x2c] sm:$0xf]
        %v2832 = vld [vmem:[%s7 + $0x30] sm:$0xf]
        %v2833 = vld [vmem:[%s7 + $0x34] sm:$0xf]
        %v2834 = vld [vmem:[%s7 + $0x38] sm:$0xf]
        %v2835 = vld [vmem:[%s7 + $0x3c] sm:$0xf]
        %v2836 = vld [vmem:[%s8] sm:$0x1]
        %v2838 = vlaneseq
        %v2839 = vshrl.u32 %v2838, 7
        %v2840 = vsub.s32 0, %v2839
        %v2841 = vrot.slane %v2836, %v2840
        %v2859 = vunpack.c.l.b16 %v2820
        %v2860 = vunpack.c.l.b16 %v2821
        %v2861 = vunpack.c.l.b16 %v2822
        %v2862 = vunpack.c.l.b16 %v2823
        %v2863 = vunpack.c.l.b16 %v2824
        %v2864 = vunpack.c.l.b16 %v2825
        %v2865 = vunpack.c.l.b16 %v2826
        %v2866 = vunpack.c.l.b16 %v2827
        %v2867 = vunpack.c.l.b16 %v2828
        %v2868 = vunpack.c.l.b16 %v2829
        %v2869 = vunpack.c.l.b16 %v2830
        %v2870 = vunpack.c.l.b16 %v2831
        %v2871 = vunpack.c.l.b16 %v2832
        %v2872 = vunpack.c.l.b16 %v2833
        %v2873 = vunpack.c.l.b16 %v2834
        %v2874 = vunpack.c.l.b16 %v2835
        %v2875 = vpack.c.b16 %v2860, %v2859
        %v2876 = vpack.c.b16 %v2862, %v2861
        %v2877 = vpack.c.b16 %v2864, %v2863
        %v2878 = vpack.c.b16 %v2866, %v2865
        %v2879 = vpack.c.b16 %v2868, %v2867
        %v2880 = vpack.c.b16 %v2870, %v2869
        %v2881 = vpack.c.b16 %v2872, %v2871
        %v2882 = vpack.c.b16 %v2874, %v2873
        %2891 = vmatprep.subr.bf16.mxu0 0
        %2892 = vmatpush1.bf16.msra.mxu0 %v2882
        %2893 = vmatprep.subr.bf16.mxu0 0
        %2894 = vmatpush1.bf16.msra.mxu0 %v2881
        %2895 = vmatprep.subr.bf16.mxu0 0
        %2896 = vmatpush1.bf16.msra.mxu0 %v2880
        %2897 = vmatprep.subr.bf16.mxu0 0
        %2898 = vmatpush1.bf16.msra.mxu0 %v2879
        %2899 = vmatprep.subr.bf16.mxu0 0
        %2900 = vmatpush1.bf16.msra.mxu0 %v2878
        %2901 = vmatprep.subr.bf16.mxu0 0
        %2902 = vmatpush1.bf16.msra.mxu0 %v2877
        %2903 = vmatprep.subr.bf16.mxu0 0
        %2904 = vmatpush1.bf16.msra.mxu0 %v2876
        %2905 = vmatprep.subr.bf16.mxu0 0
        %2906 = vmatpush1.bf16.msra.mxu0 %v2875
        %2907 = vmatprep.subr.bf16.mxu0 0
        %2908 = vmatpush2.bf16.msra.mxu0 0
        %2909 = vmatprep.subr.bf16.mxu0 0
        %2910 = vmatpush2.bf16.msra.mxu0 0
        %2911 = vmatprep.subr.bf16.mxu0 0
        %2912 = vmatpush2.bf16.msra.mxu0 0
        %2913 = vmatprep.subr.bf16.mxu0 0
        %2914 = vmatpush2.bf16.msra.mxu0 0
        %2915 = vmatprep.subr.bf16.mxu0 0
        %2916 = vmatpush2.bf16.msra.mxu0 0
        %2917 = vmatprep.subr.bf16.mxu0 0
        %2918 = vmatpush2.bf16.msra.mxu0 0
        %2919 = vmatprep.subr.bf16.mxu0 0
        %2920 = vmatpush2.bf16.msra.mxu0 0
        %2921 = vmatprep.subr.bf16.mxu0 0
        %2922 = vmatpush2.bf16.msra.mxu0 0
        %2923 = vmatprep.mubr.bf16.mxu0 0
        %2924 = vmatmul.mubr.bf16.gmra.mxu0 %v2819
        %v2925 = vpop.f32.mrf.mxu0
        %v2926 = vadd.f32 %v2841, %v2925
        %v2927 = vpop.f32.mrf.mxu0
        %v2928 = vpop.f32.mrf.mxu0
        %v2929 = vpop.f32.mrf.mxu0
        %2930 = vdwg.mxu0
        %v2931 = vmax.f32 %v2926, 0.0
        %v2932 = vpack.c.bf16 %v2931, %v2931
        %v2933 = vld [vmem:[%s9] sm:$0xf]
        %v2934 = vld [vmem:[%s9 + $0x4] sm:$0xf]
        %v2935 = vld [vmem:[%s9 + $0x8] sm:$0xf]
        %v2936 = vld [vmem:[%s9 + $0xc] sm:$0xf]
        %v2937 = vld [vmem:[%s9 + $0x10] sm:$0xf]
        %v2938 = vld [vmem:[%s9 + $0x14] sm:$0xf]
        %v2939 = vld [vmem:[%s9 + $0x18] sm:$0xf]
        %v2940 = vld [vmem:[%s9 + $0x1c] sm:$0xf]
        %v2941 = vld [vmem:[%s10] sm:$0x1]
        %v2943 = vlaneseq
        %v2944 = vshrl.u32 %v2943, 7
        %v2945 = vsub.s32 0, %v2944
        %v2946 = vrot.slane %v2941, %v2945
        %v2956 = vunpack.c.l.b16 %v2933
        %v2957 = vunpack.c.l.b16 %v2934
        %v2958 = vunpack.c.l.b16 %v2935
        %v2959 = vunpack.c.l.b16 %v2936
        %v2960 = vunpack.c.l.b16 %v2937
        %v2961 = vunpack.c.l.b16 %v2938
        %v2962 = vunpack.c.l.b16 %v2939
        %v2963 = vunpack.c.l.b16 %v2940
        %v2964 = vpack.c.b16 %v2957, %v2956
        %v2965 = vpack.c.b16 %v2959, %v2958
        %v2966 = vpack.c.b16 %v2961, %v2960
        %v2967 = vpack.c.b16 %v2963, %v2962
        %vm2972 = vcmask 523264
        %v2974 = vsel %vm2972, %v2932, 0
        %2976 = vmatprep.subr.bf16.mxu0 0
        %2977 = vmatpush1.bf16.msra.mxu0 0
        %2978 = vmatprep.subr.bf16.mxu0 0
        %2979 = vmatpush1.bf16.msra.mxu0 0
        %2980 = vmatprep.subr.bf16.mxu0 0
        %2981 = vmatpush1.bf16.msra.mxu0 0
        %2982 = vmatprep.subr.bf16.mxu0 0
        %2983 = vmatpush1.bf16.msra.mxu0 0
        %2984 = vmatprep.subr.bf16.mxu0 0
        %2985 = vmatpush1.bf16.msra.mxu0 %v2967
        %2986 = vmatprep.subr.bf16.mxu0 0
        %2987 = vmatpush1.bf16.msra.mxu0 %v2966
        %2988 = vmatprep.subr.bf16.mxu0 0
        %2989 = vmatpush1.bf16.msra.mxu0 %v2965
        %2990 = vmatprep.subr.bf16.mxu0 0
        %2991 = vmatpush1.bf16.msra.mxu0 %v2964
        %2992 = vmatprep.subr.bf16.mxu0 0
        %2993 = vmatpush2.bf16.msra.mxu0 0
        %2994 = vmatprep.subr.bf16.mxu0 0
        %2995 = vmatpush2.bf16.msra.mxu0 0
        %2996 = vmatprep.subr.bf16.mxu0 0
        %2997 = vmatpush2.bf16.msra.mxu0 0
        %2998 = vmatprep.subr.bf16.mxu0 0
        %2999 = vmatpush2.bf16.msra.mxu0 0
        %3000 = vmatprep.subr.bf16.mxu0 0
        %3001 = vmatpush2.bf16.msra.mxu0 0
        %3002 = vmatprep.subr.bf16.mxu0 0
        %3003 = vmatpush2.bf16.msra.mxu0 0
        %3004 = vmatprep.subr.bf16.mxu0 0
        %3005 = vmatpush2.bf16.msra.mxu0 0
        %3006 = vmatprep.subr.bf16.mxu0 0
        %3007 = vmatpush2.bf16.msra.mxu0 0
        %3008 = vmatprep.mubr.bf16.mxu0 0
        %3009 = vmatmul.mubr.bf16.gmra.mxu0 %v2974
        %v3010 = vpop.f32.mrf.mxu0
        %v3011 = vadd.f32 %v2946, %v3010
        %v3012 = vpop.f32.mrf.mxu0
        %v3013 = vpop.f32.mrf.mxu0
        %v3014 = vpop.f32.mrf.mxu0
        %3015 = vdwg.mxu0
        %3016 = vst [vmem:[%s423] sm:$0xff] %v3011
        %s3017 = sand.u32 %s271, 1
        %s3018 = scalar_lea.sflag [#allocation4], %s3017
        %s3019 = sand.u32 %s271, 1
        %s3020 = smul.addr %s3019, 8
        %s3021 = scalar_lea.vmem [#allocation8], %s3020
        // Predicated region
        $region77: #{tpu_custom_call.1} parent=63 // pred_check
          %p3022 = pneg %p281
        $region78: #{tpu_custom_call.1} parent=63 // pred_check_branch
          %3024 = sbr.rel (%p3022) target = $region80
        $region79: #{tpu_custom_call.1} parent=63 // pred_region
          %s3026 = ssub.s32 128, 128
          %3027 = vsyncadd %s3018, %s3026
          %s3028 = smul.addr %s27, 128
          %s3029 = scalar_lea.hbm %s11, %s3028
          %s3031 = sshll.u32 %s3021, 4
          %s3032 = int_to_ptr.vmem [resolvable:$true] %s3031
          %3034 = dma.vmem_to_hbm [thread:$0]  %s3032, 128, %s3029, %s3018
        $region80: #{tpu_custom_call.1} parent=63 // pred_fallthru
          _
      $region64: #{tpu_custom_call.1} parent=5 // pred_fallthru
        _
      %p3035 = scmp.le.s32.totalorder 2, %s22
      // Predicated region
      $region81: #{tpu_custom_call.1} parent=5 // pred_check
        %p3036 = pneg %p3035
      $region82: #{tpu_custom_call.1} parent=5 // pred_check_branch
        %3038 = sbr.rel (%p3036) target = $region84
      $region83: #{tpu_custom_call.1} parent=5 // pred_region
        %s3039 = ssub.s32 %s22, 2
        // Predicated region
        $region85: #{tpu_custom_call.1} parent=83 // pred_check
          %p3040 = pneg %p287
        $region86: #{tpu_custom_call.1} parent=83 // pred_check_branch
          %3042 = sbr.rel (%p3040) target = $region88
        $region87: #{tpu_custom_call.1} parent=83 // pred_region
          %s3043 = sand.u32 %s272, 1
          %s3044 = scalar_lea.sflag [#allocation4], %s3043
          %s3045 = sand.u32 %s272, 1
          %s3046 = smul.addr %s3045, 8
          %s3047 = scalar_lea.vmem [#allocation8], %s3046
          %3048 = dma.done %s3044, 128
        $region88: #{tpu_custom_call.1} parent=83 // pred_fallthru
          _
      $region84: #{tpu_custom_call.1} parent=5 // pred_fallthru
        _
    $region6: #{tpu_custom_call.1} parent=1 // loop_footer
      %s26 = sadd.s32 1, %s22
    $region7: #{tpu_custom_call.1} parent=1 // loop_footer_branch
      %21 = sbr.rel target = $region3
    $region8: #{tpu_custom_call.1} parent=1 // loop_exit
      _
    %3049 = vsyncpa [#allocation3], 1
    %s3050 = scalar_lea.sflag [#allocation3], 1
    %3051 = vsyncpa %s3050, 1
    %3052 = vsyncpa [#allocation6], 1
    %3053 = vsyncpa [#allocation4], 1
    %s3054 = scalar_lea.sflag [#allocation4], 1
    %3055 = vsyncpa %s3054, 1

</llo_original>
